<compile_context>
chip_gen: v7x
topology: tpu7x:2x2x1
jax: 0.10.0
libtpu: 0.0.40
codegen_flags: <defaults>
</compile_context>

<pallas_src>
import functools
import math

import jax
import jax.numpy as jnp
from jax.experimental import pallas as pl
from jax.experimental.pallas import tpu as pltpu


# ----------------------------- helpers -----------------------------

def _vmem_limit_bytes():
    """~75% of physical VMEM: ~48 MiB on v7x (64 MiB), ~96 MiB on v5e/v6e (128 MiB)."""
    cap = 64 * 1024 * 1024
    try:
        info = pltpu.get_tpu_info()
        cap = int(getattr(info, "vmem_capacity_bytes", None) or cap)
    except Exception:
        pass
    return int(min(cap * 3 // 4, 112 * 1024 * 1024))


_VMEM_LIMIT = _vmem_limit_bytes()


def _tile_and_pad(dim, target):
    """Return (tile, padded_dim).

    dim <= target      -> single full-extent block, no padding (full-extent
                          blocks are exempt from the (8,128) divisibility rule).
    dim %  target == 0 -> tile = target, no padding.
    otherwise          -> tile = target, dim padded up to a multiple of target;
                          zero padding contributes 0 to K-contractions and is
                          sliced off the output.
    """
    if dim <= target:
        return dim, dim
    if dim % target == 0:
        return target, dim
    return target, ((dim + target - 1) // target) * target


# ----------------------------- tiled matmul + bias (+GELU) -----------------------------

def _matmul_bias_kernel(x_ref, w_ref, b_ref, o_ref, acc_ref, *, activation):
    @pl.when(pl.program_id(2) == 0)
    def _():
        acc_ref[...] = jnp.zeros_like(acc_ref)

    acc_ref[...] += jnp.dot(x_ref[...], w_ref[...],
                            preferred_element_type=jnp.float32)

    @pl.when(pl.program_id(2) == pl.num_programs(2) - 1)
    def _():
        acc = acc_ref[...] + b_ref[...]
        if activation == "gelu":
            # TODO(synk): PyTorch nn.GELU defaults to exact erf GELU; tanh
            # approximation used here for guaranteed Mosaic lowering.
            acc = jax.nn.gelu(acc, approximate=True)
        o_ref[...] = acc.astype(o_ref.dtype)


def matmul_bias(x, w, b, activation=None, out_dtype=None, tm=512, tn=512, tk=512):
    """x: [M, K] bf16; w: [K, N]; b: [N] -> [M, N]."""
    M, K = x.shape
    K2, N = w.shape
    assert K == K2
    out_dtype = out_dtype or x.dtype

    tm, Mp = _tile_and_pad(M, tm)
    tn, Np = _tile_and_pad(N, tn)
    tk, Kp = _tile_and_pad(K, tk)

    if (Mp, Kp) != (M, K):
        x = jnp.pad(x, ((0, Mp - M), (0, Kp - K)))
    if (Kp, Np) != (K, N):
        w = jnp.pad(w, ((0, Kp - K), (0, Np - N)))
    b2 = b.reshape(1, N).astype(jnp.float32)
    if Np != N:
        b2 = jnp.pad(b2, ((0, 0), (0, Np - N)))

    grid = (Mp // tm, Np // tn, Kp // tk)

    cost = pl.CostEstimate(
        flops=int(2 * M * N * K),
        transcendentals=int(M * N if activation == "gelu" else 0),
        bytes_accessed=int(M * K * x.dtype.itemsize + K * N * w.dtype.itemsize
                           + M * N * jnp.dtype(out_dtype).itemsize + N * 4),
    )

    out = pl.pallas_call(
        functools.partial(_matmul_bias_kernel, activation=activation),
        out_shape=jax.ShapeDtypeStruct((Mp, Np), out_dtype),
        grid=grid,
        in_specs=[
            pl.BlockSpec((tm, tk), lambda i, j, k: (i, k)),
            pl.BlockSpec((tk, tn), lambda i, j, k: (k, j)),
            pl.BlockSpec((1, tn), lambda i, j, k: (0, j)),
        ],
        out_specs=pl.BlockSpec((tm, tn), lambda i, j, k: (i, j)),
        scratch_shapes=[pltpu.VMEM((tm, tn), jnp.float32)],
        compiler_params=pltpu.CompilerParams(
            dimension_semantics=("parallel", "parallel", "arbitrary"),
            vmem_limit_bytes=_VMEM_LIMIT),
        cost_estimate=cost,
    )(x, w, b2)

    if (Mp, Np) != (M, N):
        out = out[:M, :N]
    return out


# ----------------------------- fused residual + layernorm -----------------------------

def _ln_residual_kernel(x_ref, y_ref, gb_ref, o_ref, *, eps):
    # Residual add fused into the layernorm's HBM pass; math in f32.
    x = x_ref[...].astype(jnp.float32) + y_ref[...].astype(jnp.float32)
    mean = jnp.mean(x, axis=-1, keepdims=True)
    var = jnp.mean(jnp.square(x - mean), axis=-1, keepdims=True)
    y = (x - mean) * jax.lax.rsqrt(var + eps)
    o_ref[...] = (y * gb_ref[0:1, :] + gb_ref[1:2, :]).astype(o_ref.dtype)


def layernorm_residual(x, y, gb, eps=1e-5):
    """LayerNorm(x + y); x, y: [M, D] bf16; gb: [2, D] f32 (row0=gamma, row1=beta)."""
    M, D = x.shape
    tm, Mp = _tile_and_pad(M, 512)
    if Mp != M:
        x = jnp.pad(x, ((0, Mp - M), (0, 0)))
        y = jnp.pad(y, ((0, Mp - M), (0, 0)))
    out = pl.pallas_call(
        functools.partial(_ln_residual_kernel, eps=eps),
        out_shape=jax.ShapeDtypeStruct((Mp, D), x.dtype),
        grid=(Mp // tm,),
        in_specs=[
            pl.BlockSpec((tm, D), lambda i: (i, 0)),
            pl.BlockSpec((tm, D), lambda i: (i, 0)),
            pl.BlockSpec((2, D), lambda i: (0, 0)),
        ],
        out_specs=pl.BlockSpec((tm, D), lambda i: (i, 0)),
        compiler_params=pltpu.CompilerParams(
            dimension_semantics=("parallel",),
            vmem_limit_bytes=_VMEM_LIMIT),
    )(x, y, gb)
    if Mp != M:
        out = out[:M]
    return out


# ----------------------------- attention -----------------------------

def _attention_kernel(q_ref, k_ref, v_ref, pad_ref, o_ref, *, scale):
    # One (batch, head) tile: q/k/v [S, Dh] bf16, pad [1, S] additive f32.
    S = q_ref.shape[0]
    s = jax.lax.dot_general(q_ref[...], k_ref[...],
                            dimension_numbers=(((1,), (1,)), ((), ())),
                            preferred_element_type=jnp.float32)        # [S, S]
    # Causal + padding applied per tile by predicate: no [S,S] additive mask
    # materialized / DMA'd.  Finite -1e30 keeps fully-masked rows finite.
    row = jax.lax.broadcasted_iota(jnp.int32, (S, S), 0)
    col = jax.lax.broadcasted_iota(jnp.int32, (S, S), 1)
    s = jnp.where(row >= col, s * scale + pad_ref[...], -1e30)
    m = jnp.max(s, axis=-1, keepdims=True)
    p = jnp.exp(s - m)                                                 # unnormalized
    denom = jnp.sum(p, axis=-1, keepdims=True)
    acc = jnp.dot(p.astype(v_ref.dtype), v_ref[...],
                  preferred_element_type=jnp.float32)                  # [S, Dh]
    # Normalize AFTER PV: O(S*Dh) multiplies instead of O(S^2); EUP reciprocal.
    o_ref[...] = (acc * pl.reciprocal(denom, approx=True)).astype(o_ref.dtype)


def attention(q, k, v, pad_add):
    """q, k, v: [B, H, S, Dh] bf16; pad_add: [B, 1, S] additive f32 -> [B, H, S, Dh]."""
    B, H, S, Dh = q.shape
    scale = 1.0 / math.sqrt(Dh)
    # TODO(synk): whole-S scores per (batch, head); for S >= ~1K (esp. v7x's
    # 64 MiB VMEM) switch to flash-style KV tiling with m/l/acc scratch.
    cost = pl.CostEstimate(
        flops=int(4 * B * H * S * S * Dh),
        transcendentals=int(B * H * S * S),
        bytes_accessed=int(4 * B * H * S * Dh * q.dtype.itemsize + B * S * 4),
    )
    qkv_spec = pl.BlockSpec((None, None, S, Dh), lambda b, h: (b, h, 0, 0))
    return pl.pallas_call(
        functools.partial(_attention_kernel, scale=scale),
        out_shape=jax.ShapeDtypeStruct((B, H, S, Dh), q.dtype),
        grid=(B, H),
        in_specs=[qkv_spec, qkv_spec, qkv_spec,
                  pl.BlockSpec((None, 1, S), lambda b, h: (b, 0, 0))],
        out_specs=pl.BlockSpec((None, None, S, Dh), lambda b, h: (b, h, 0, 0)),
        compiler_params=pltpu.CompilerParams(
            dimension_semantics=("parallel", "parallel"),
            vmem_limit_bytes=_VMEM_LIMIT),
        cost_estimate=cost,
    )(q, k, v, pad_add)


# ----------------------------- model (glue) -----------------------------

def init_params(key, vocab_size, emb_dim, num_heads, max_seq_len,
                ff_multiplier, num_blocks):
    std = 0.02
    keys = jax.random.split(key, 2 + 4 * num_blocks)
    ki = iter(keys)

    def w(shape):
        return (std * jax.random.normal(next(ki), shape, jnp.float32)
                ).astype(jnp.bfloat16)

    def ln_gb(d):
        return jnp.concatenate([jnp.ones((1, d), jnp.float32),
                                jnp.zeros((1, d), jnp.float32)], axis=0)

    params = {
        "emb": w((vocab_size, emb_dim)),       # tied lm_head weight
        "pos_emb": w((max_seq_len, emb_dim)),  # bf16: avoids an f32 [B,S,D] slab
        "lm_bias": jnp.zeros((vocab_size,), jnp.float32),
        "blocks": [],
    }
    hidden = emb_dim * ff_multiplier
    for _ in range(num_blocks):
        bp = {
            # Fused QKV projection; columns laid out as [3, H, Dh] (Q|K|V,
            # head-major) so the output reshapes straight to per-head tiles.
            # (Pure layout plumbing; reorder columns when importing a PyTorch
            # checkpoint.)
            "w_qkv": w((emb_dim, 3 * emb_dim)),
            "b_qkv": jnp.zeros((3 * emb_dim,), jnp.float32),
            "wo": w((emb_dim, emb_dim)),
            "bo": jnp.zeros((emb_dim,), jnp.float32),
            "ln1_gb": ln_gb(emb_dim),
            "ff_w1": w((emb_dim, hidden)),
            "ff_b1": jnp.zeros((hidden,), jnp.float32),
            "ff_w2": w((hidden, emb_dim)),
            "ff_b2": jnp.zeros((emb_dim,), jnp.float32),
            "ln2_gb": ln_gb(emb_dim),
        }
        params["blocks"].append(bp)
    return params


def build_pad_mask(mask):
    """[B, S] {0,1} -> additive [B, 1, S]: 0 keep / -1e30 drop.

    Finite large-negative instead of -inf so fully-masked query rows produce a
    uniform (finite) distribution rather than NaN.
    """
    B, S = mask.shape
    return ((1.0 - mask.astype(jnp.float32)) * (-1e30)).reshape(B, 1, S)


def transformer_block(h2d, pad_add, bp, num_heads):
    """h2d: [B*S, D] bf16; pad_add: [B, 1, S] f32."""
    M, D = h2d.shape
    B = pad_add.shape[0]
    S = M // B
    H = num_heads
    Dh = D // H

    qkv = matmul_bias(h2d, bp["w_qkv"], bp["b_qkv"])                 # [B*S, 3D]
    # Layout plumbing only: [B*S, 3*H*Dh] -> [3, B, H, S, Dh] so attention runs
    # on a (B, H) grid and never slices heads at non-128 lane offsets in-kernel.
    qkv = qkv.reshape(B, S, 3, H, Dh).transpose(2, 0, 3, 1, 4)
    attn = attention(qkv[0], qkv[1], qkv[2], pad_add)                # [B, H, S, Dh]
    attn = attn.transpose(0, 2, 1, 3).reshape(M, D)                  # [B*S, D]
    proj = matmul_bias(attn, bp["wo"], bp["bo"])

    # TODO(synk): dropout (drop_prob) treated as identity (eval mode).
    # TODO(synk): TransformerDecoderBlock source not provided; standard post-LN
    # residual GPT decoder block assumed.
    h1 = layernorm_residual(h2d, proj, bp["ln1_gb"])

    ff = matmul_bias(h1, bp["ff_w1"], bp["ff_b1"], activation="gelu")
    ff = matmul_bias(ff, bp["ff_w2"], bp["ff_b2"])
    return layernorm_residual(h1, ff, bp["ln2_gb"])


@functools.partial(jax.jit, static_argnames=("num_heads",))
def gpt_forward(params, x_ids, mask, num_heads):
    B, S = x_ids.shape
    V, D = params["emb"].shape

    # Embedding gather + learnable positional embedding (XLA, bf16 end-to-end).
    h = jnp.take(params["emb"], x_ids, axis=0) + params["pos_emb"][:S][None, :, :]
    h2d = h.reshape(B * S, D)

    pad_add = build_pad_mask(mask)                                   # [B, 1, S]

    for bp in params["blocks"]:
        h2d = transformer_block(h2d, pad_add, bp, num_heads)

    # Tied lm_head: one-time [V,D]->[D,V] bf16 copy instead of per-tile XLU
    # transposes inside the matmul K-loop.
    logits = matmul_bias(h2d, params["emb"].T, params["lm_bias"],
                         out_dtype=jnp.float32)
    return logits.reshape(B, S, V)


# ----------------------------- demo -----------------------------

if __name__ == "__main__":
    vocab_size = 64
    emb_dim = 32
    num_heads = 4
    max_seq_len = 16
    ff_multiplier = 4
    num_blocks = 2
    batch, seq = 2, 8

    key = jax.random.PRNGKey(0)
    k_param, k_ids = jax.random.split(key)
    params = init_params(k_param, vocab_size, emb_dim, num_heads,
                         max_seq_len, ff_multiplier, num_blocks)

    x_ids = jax.random.randint(k_ids, (batch, seq), 0, vocab_size, dtype=jnp.int32)
    mask = jnp.ones((batch, seq), jnp.int32)
    mask = mask.at[1, -2:].set(0)   # pad the tail of the second sequence

    out = gpt_forward(params, x_ids, mask, num_heads=num_heads)
    out = jax.block_until_ready(out)

    assert out.shape == (batch, seq, vocab_size), out.shape
    assert jnp.all(jnp.isfinite(out)), "non-finite logits"
    print("KERNEL_OK")
</pallas_src>

<mosaic_0001>
module attributes {stable_mosaic.version = 11 : i64} {
  func.func @_attention_kernel(%arg0: i32, %arg1: i32, %arg2: memref<1x1x8x8xbf16, #tpu.memory_space<vmem>>, %arg3: memref<1x1x8x8xbf16, #tpu.memory_space<vmem>>, %arg4: memref<1x1x8x8xbf16, #tpu.memory_space<vmem>>, %arg5: memref<1x1x8xf32, #tpu.memory_space<vmem>>, %arg6: memref<1x1x8x8xbf16, #tpu.memory_space<vmem>>) attributes {dimension_semantics = [#tpu.dimension_semantics<parallel>, #tpu.dimension_semantics<parallel>], iteration_bounds = array<i64: 2, 4>, scalar_prefetch = 0 : i64, scratch_operands = 0 : i64, tpu.core_type = #tpu.core_type<tc>, window_params = [{transform_indices = @transform_0, window_bounds = array<i64: 1, 1, 8, 8>}, {transform_indices = @transform_1, window_bounds = array<i64: 1, 1, 8, 8>}, {transform_indices = @transform_2, window_bounds = array<i64: 1, 1, 8, 8>}, {transform_indices = @transform_3, window_bounds = array<i64: 1, 1, 8>}, {transform_indices = @transform_4, window_bounds = array<i64: 1, 1, 8, 8>}]} {
    %c0 = arith.constant 0 : index
    %c0_0 = arith.constant 0 : index
    %c0_1 = arith.constant 0 : index
    %c0_2 = arith.constant 0 : index
    %0 = vector.load %arg2[%c0, %c0_0, %c0_1, %c0_2] : memref<1x1x8x8xbf16, #tpu.memory_space<vmem>>, vector<1x1x8x8xbf16>
    %1 = vector.shape_cast %0 : vector<1x1x8x8xbf16> to vector<8x8xbf16>
    %c0_3 = arith.constant 0 : index
    %c0_4 = arith.constant 0 : index
    %c0_5 = arith.constant 0 : index
    %c0_6 = arith.constant 0 : index
    %2 = vector.load %arg3[%c0_3, %c0_4, %c0_5, %c0_6] : memref<1x1x8x8xbf16, #tpu.memory_space<vmem>>, vector<1x1x8x8xbf16>
    %3 = vector.shape_cast %2 : vector<1x1x8x8xbf16> to vector<8x8xbf16>
    %cst = arith.constant dense<0.000000e+00> : vector<8x8xf32>
    %4 = tpu.matmul %1, %3, %cst {dimension_numbers = #tpu.dot_dimension_numbers<[1], [1], [0], [0], [0, 0, 1, 0], [], []>} : vector<8x8xbf16>, vector<8x8xbf16>, vector<8x8xf32> -> vector<8x8xf32>
    %5 = tpu.iota {dimensions = array<i32: 0>} : vector<8x8xi32>
    %6 = tpu.iota {dimensions = array<i32: 1>} : vector<8x8xi32>
    %7 = arith.cmpi sge, %5, %6 : vector<8x8xi32>
    %cst_7 = arith.constant 0.353553385 : f32
    %8 = vector.broadcast %cst_7 : f32 to vector<8x8xf32>
    %9 = arith.mulf %4, %8 : vector<8x8xf32>
    %c0_8 = arith.constant 0 : index
    %c0_9 = arith.constant 0 : index
    %c0_10 = arith.constant 0 : index
    %10 = vector.load %arg5[%c0_8, %c0_9, %c0_10] : memref<1x1x8xf32, #tpu.memory_space<vmem>>, vector<1x1x8xf32>
    %11 = vector.shape_cast %10 : vector<1x1x8xf32> to vector<1x8xf32>
    %12 = vector.broadcast %11 : vector<1x8xf32> to vector<8x8xf32>
    %13 = arith.addf %9, %12 : vector<8x8xf32>
    %cst_11 = arith.constant -1.000000e+30 : f32
    %14 = vector.broadcast %cst_11 : f32 to vector<8x8xf32>
    %15 = arith.select %7, %13, %14 : vector<8x8xi1>, vector<8x8xf32>
    %cst_12 = arith.constant dense<0xFF800000> : vector<8xf32>
    %16 = vector.multi_reduction <maximumf>, %15, %cst_12 [1] : vector<8x8xf32> to vector<8xf32>
    %17 = vector.shape_cast %16 : vector<8xf32> to vector<8x1xf32>
    %18 = vector.broadcast %17 : vector<8x1xf32> to vector<8x8xf32>
    %19 = arith.subf %15, %18 : vector<8x8xf32>
    %20 = math.exp %19 : vector<8x8xf32>
    %cst_13 = arith.constant dense<0.000000e+00> : vector<8xf32>
    %21 = vector.multi_reduction <add>, %20, %cst_13 [1] : vector<8x8xf32> to vector<8xf32>
    %22 = vector.shape_cast %21 : vector<8xf32> to vector<8x1xf32>
    %23 = arith.truncf %20 : vector<8x8xf32> to vector<8x8xbf16>
    %c0_14 = arith.constant 0 : index
    %c0_15 = arith.constant 0 : index
    %c0_16 = arith.constant 0 : index
    %c0_17 = arith.constant 0 : index
    %24 = vector.load %arg4[%c0_14, %c0_15, %c0_16, %c0_17] : memref<1x1x8x8xbf16, #tpu.memory_space<vmem>>, vector<1x1x8x8xbf16>
    %25 = vector.shape_cast %24 : vector<1x1x8x8xbf16> to vector<8x8xbf16>
    %cst_18 = arith.constant dense<0.000000e+00> : vector<8x8xf32>
    %26 = tpu.matmul %23, %25, %cst_18 {dimension_numbers = #tpu.dot_dimension_numbers<[1], [0], [0], [1], [0, 0, 1, 1], [], []>} : vector<8x8xbf16>, vector<8x8xbf16>, vector<8x8xf32> -> vector<8x8xf32>
    %27 = tpu.reciprocal %22 {approx = true} : vector<8x1xf32> -> vector<8x1xf32>
    %28 = vector.broadcast %27 : vector<8x1xf32> to vector<8x8xf32>
    %29 = arith.mulf %26, %28 : vector<8x8xf32>
    %30 = arith.truncf %29 : vector<8x8xf32> to vector<8x8xbf16>
    %c0_19 = arith.constant 0 : index
    %c0_20 = arith.constant 0 : index
    %c0_21 = arith.constant 0 : index
    %c0_22 = arith.constant 0 : index
    %31 = vector.load %arg6[%c0_19, %c0_20, %c0_21, %c0_22] : memref<1x1x8x8xbf16, #tpu.memory_space<vmem>>, vector<1x1x8x8xbf16>
    %32 = vector.shape_cast %31 : vector<1x1x8x8xbf16> to vector<8x8xbf16>
    %33 = vector.shape_cast %30 : vector<8x8xbf16> to vector<1x1x8x8xbf16>
    tpu.vector_store %arg6[%c0_19, %c0_20, %c0_21, %c0_22], %33 {strides = array<i32>} : memref<1x1x8x8xbf16, #tpu.memory_space<vmem>>, vector<1x1x8x8xbf16>,
    return
  }
  func.func @transform_0(%arg0: i32, %arg1: i32) -> (i32, i32, i32, i32) {
    %c0_i32 = arith.constant 0 : i32
    %c0_i32_0 = arith.constant 0 : i32
    %c0_i32_1 = arith.constant 0 : i32
    return %arg0, %arg1, %c0_i32, %c0_i32_0 : i32, i32, i32, i32
  }
  func.func @transform_1(%arg0: i32, %arg1: i32) -> (i32, i32, i32, i32) {
    %c0_i32 = arith.constant 0 : i32
    %c0_i32_0 = arith.constant 0 : i32
    %c0_i32_1 = arith.constant 0 : i32
    return %arg0, %arg1, %c0_i32, %c0_i32_0 : i32, i32, i32, i32
  }
  func.func @transform_2(%arg0: i32, %arg1: i32) -> (i32, i32, i32, i32) {
    %c0_i32 = arith.constant 0 : i32
    %c0_i32_0 = arith.constant 0 : i32
    %c0_i32_1 = arith.constant 0 : i32
    return %arg0, %arg1, %c0_i32, %c0_i32_0 : i32, i32, i32, i32
  }
  func.func @transform_3(%arg0: i32, %arg1: i32) -> (i32, i32, i32) {
    %c0_i32 = arith.constant 0 : i32
    %c0_i32_0 = arith.constant 0 : i32
    %c0_i32_1 = arith.constant 0 : i32
    return %arg0, %c0_i32, %c0_i32_0 : i32, i32, i32
  }
  func.func @transform_4(%arg0: i32, %arg1: i32) -> (i32, i32, i32, i32) {
    %c0_i32 = arith.constant 0 : i32
    %c0_i32_0 = arith.constant 0 : i32
    %c0_i32_1 = arith.constant 0 : i32
    return %arg0, %arg1, %c0_i32, %c0_i32_0 : i32, i32, i32, i32
  }
}

module attributes {stable_mosaic.version = 11 : i64} {
  func.func @_matmul_bias_kernel(%arg0: i32, %arg1: i32, %arg2: i32, %arg3: memref<16x32xbf16, #tpu.memory_space<vmem>>, %arg4: memref<32x96xbf16, #tpu.memory_space<vmem>>, %arg5: memref<1x96xf32, #tpu.memory_space<vmem>>, %arg6: memref<16x96xbf16, #tpu.memory_space<vmem>>, %arg7: memref<16x96xf32, #tpu.memory_space<vmem>>) attributes {dimension_semantics = [#tpu.dimension_semantics<parallel>, #tpu.dimension_semantics<parallel>, #tpu.dimension_semantics<arbitrary>], iteration_bounds = array<i64: 1, 1, 1>, scalar_prefetch = 0 : i64, scratch_operands = 1 : i64, tpu.core_type = #tpu.core_type<tc>, window_params = [{transform_indices = @transform_0, window_bounds = array<i64: 16, 32>}, {transform_indices = @transform_1, window_bounds = array<i64: 32, 96>}, {transform_indices = @transform_2, window_bounds = array<i64: 1, 96>}, {transform_indices = @transform_3, window_bounds = array<i64: 16, 96>}]} {
    %c0_i32 = arith.constant 0 : i32
    %0 = arith.cmpi eq, %arg2, %c0_i32 : i32
    %1 = arith.extui %0 : i1 to i32
    %c0_i32_0 = arith.constant 0 : i32
    %2 = arith.cmpi ne, %1, %c0_i32_0 : i32
    scf.if %2 {
      %cst_10 = arith.constant 0.000000e+00 : f32
      %12 = vector.broadcast %cst_10 : f32 to vector<16x96xf32>
      %c0_11 = arith.constant 0 : index
      %c0_12 = arith.constant 0 : index
      %13 = vector.load %arg7[%c0_11, %c0_12] : memref<16x96xf32, #tpu.memory_space<vmem>>, vector<16x96xf32>
      tpu.vector_store %arg7[%c0_11, %c0_12], %12 {strides = array<i32>} : memref<16x96xf32, #tpu.memory_space<vmem>>, vector<16x96xf32>,
    } else {
    }
    %c0 = arith.constant 0 : index
    %c0_1 = arith.constant 0 : index
    %3 = vector.load %arg7[%c0, %c0_1] : memref<16x96xf32, #tpu.memory_space<vmem>>, vector<16x96xf32>
    %c0_2 = arith.constant 0 : index
    %c0_3 = arith.constant 0 : index
    %4 = vector.load %arg3[%c0_2, %c0_3] : memref<16x32xbf16, #tpu.memory_space<vmem>>, vector<16x32xbf16>
    %c0_4 = arith.constant 0 : index
    %c0_5 = arith.constant 0 : index
    %5 = vector.load %arg4[%c0_4, %c0_5] : memref<32x96xbf16, #tpu.memory_space<vmem>>, vector<32x96xbf16>
    %cst = arith.constant dense<0.000000e+00> : vector<16x96xf32>
    %6 = tpu.matmul %4, %5, %cst {dimension_numbers = #tpu.dot_dimension_numbers<[1], [0], [0], [1], [0, 0, 1, 1], [], []>} : vector<16x32xbf16>, vector<32x96xbf16>, vector<16x96xf32> -> vector<16x96xf32>
    %7 = arith.addf %3, %6 : vector<16x96xf32>
    %c0_6 = arith.constant 0 : index
    %c0_7 = arith.constant 0 : index
    %8 = vector.load %arg7[%c0_6, %c0_7] : memref<16x96xf32, #tpu.memory_space<vmem>>, vector<16x96xf32>
    tpu.vector_store %arg7[%c0_6, %c0_7], %7 {strides = array<i32>} : memref<16x96xf32, #tpu.memory_space<vmem>>, vector<16x96xf32>,
    %c0_i32_8 = arith.constant 0 : i32
    %9 = arith.cmpi eq, %arg2, %c0_i32_8 : i32
    %10 = arith.extui %9 : i1 to i32
    %c0_i32_9 = arith.constant 0 : i32
    %11 = arith.cmpi ne, %10, %c0_i32_9 : i32
    scf.if %11 {
      %c0_10 = arith.constant 0 : index
      %c0_11 = arith.constant 0 : index
      %12 = vector.load %arg7[%c0_10, %c0_11] : memref<16x96xf32, #tpu.memory_space<vmem>>, vector<16x96xf32>
      %c0_12 = arith.constant 0 : index
      %c0_13 = arith.constant 0 : index
      %13 = vector.load %arg5[%c0_12, %c0_13] : memref<1x96xf32, #tpu.memory_space<vmem>>, vector<1x96xf32>
      %14 = vector.broadcast %13 : vector<1x96xf32> to vector<16x96xf32>
      %15 = arith.addf %12, %14 : vector<16x96xf32>
      %16 = arith.truncf %15 : vector<16x96xf32> to vector<16x96xbf16>
      %c0_14 = arith.constant 0 : index
      %c0_15 = arith.constant 0 : index
      %17 = vector.load %arg6[%c0_14, %c0_15] : memref<16x96xbf16, #tpu.memory_space<vmem>>, vector<16x96xbf16>
      tpu.vector_store %arg6[%c0_14, %c0_15], %16 {strides = array<i32>} : memref<16x96xbf16, #tpu.memory_space<vmem>>, vector<16x96xbf16>,
    } else {
    }
    return
  }
  func.func @transform_0(%arg0: i32, %arg1: i32, %arg2: i32) -> (i32, i32) {
    %c0_i32 = arith.constant 0 : i32
    return %arg0, %arg2 : i32, i32
  }
  func.func @transform_1(%arg0: i32, %arg1: i32, %arg2: i32) -> (i32, i32) {
    %c0_i32 = arith.constant 0 : i32
    return %arg2, %arg1 : i32, i32
  }
  func.func @transform_2(%arg0: i32, %arg1: i32, %arg2: i32) -> (i32, i32) {
    %c0_i32 = arith.constant 0 : i32
    %c0_i32_0 = arith.constant 0 : i32
    return %c0_i32, %arg1 : i32, i32
  }
  func.func @transform_3(%arg0: i32, %arg1: i32, %arg2: i32) -> (i32, i32) {
    %c0_i32 = arith.constant 0 : i32
    return %arg0, %arg1 : i32, i32
  }
}

module attributes {stable_mosaic.version = 11 : i64} {
  func.func @_matmul_bias_kernel(%arg0: i32, %arg1: i32, %arg2: i32, %arg3: memref<16x32xbf16, #tpu.memory_space<vmem>>, %arg4: memref<32x32xbf16, #tpu.memory_space<vmem>>, %arg5: memref<1x32xf32, #tpu.memory_space<vmem>>, %arg6: memref<16x32xbf16, #tpu.memory_space<vmem>>, %arg7: memref<16x32xf32, #tpu.memory_space<vmem>>) attributes {dimension_semantics = [#tpu.dimension_semantics<parallel>, #tpu.dimension_semantics<parallel>, #tpu.dimension_semantics<arbitrary>], iteration_bounds = array<i64: 1, 1, 1>, scalar_prefetch = 0 : i64, scratch_operands = 1 : i64, tpu.core_type = #tpu.core_type<tc>, window_params = [{transform_indices = @transform_0, window_bounds = array<i64: 16, 32>}, {transform_indices = @transform_1, window_bounds = array<i64: 32, 32>}, {transform_indices = @transform_2, window_bounds = array<i64: 1, 32>}, {transform_indices = @transform_3, window_bounds = array<i64: 16, 32>}]} {
    %c0_i32 = arith.constant 0 : i32
    %0 = arith.cmpi eq, %arg2, %c0_i32 : i32
    %1 = arith.extui %0 : i1 to i32
    %c0_i32_0 = arith.constant 0 : i32
    %2 = arith.cmpi ne, %1, %c0_i32_0 : i32
    scf.if %2 {
      %cst_10 = arith.constant 0.000000e+00 : f32
      %12 = vector.broadcast %cst_10 : f32 to vector<16x32xf32>
      %c0_11 = arith.constant 0 : index
      %c0_12 = arith.constant 0 : index
      %13 = vector.load %arg7[%c0_11, %c0_12] : memref<16x32xf32, #tpu.memory_space<vmem>>, vector<16x32xf32>
      tpu.vector_store %arg7[%c0_11, %c0_12], %12 {strides = array<i32>} : memref<16x32xf32, #tpu.memory_space<vmem>>, vector<16x32xf32>,
    } else {
    }
    %c0 = arith.constant 0 : index
    %c0_1 = arith.constant 0 : index
    %3 = vector.load %arg7[%c0, %c0_1] : memref<16x32xf32, #tpu.memory_space<vmem>>, vector<16x32xf32>
    %c0_2 = arith.constant 0 : index
    %c0_3 = arith.constant 0 : index
    %4 = vector.load %arg3[%c0_2, %c0_3] : memref<16x32xbf16, #tpu.memory_space<vmem>>, vector<16x32xbf16>
    %c0_4 = arith.constant 0 : index
    %c0_5 = arith.constant 0 : index
    %5 = vector.load %arg4[%c0_4, %c0_5] : memref<32x32xbf16, #tpu.memory_space<vmem>>, vector<32x32xbf16>
    %cst = arith.constant dense<0.000000e+00> : vector<16x32xf32>
    %6 = tpu.matmul %4, %5, %cst {dimension_numbers = #tpu.dot_dimension_numbers<[1], [0], [0], [1], [0, 0, 1, 1], [], []>} : vector<16x32xbf16>, vector<32x32xbf16>, vector<16x32xf32> -> vector<16x32xf32>
    %7 = arith.addf %3, %6 : vector<16x32xf32>
    %c0_6 = arith.constant 0 : index
    %c0_7 = arith.constant 0 : index
    %8 = vector.load %arg7[%c0_6, %c0_7] : memref<16x32xf32, #tpu.memory_space<vmem>>, vector<16x32xf32>
    tpu.vector_store %arg7[%c0_6, %c0_7], %7 {strides = array<i32>} : memref<16x32xf32, #tpu.memory_space<vmem>>, vector<16x32xf32>,
    %c0_i32_8 = arith.constant 0 : i32
    %9 = arith.cmpi eq, %arg2, %c0_i32_8 : i32
    %10 = arith.extui %9 : i1 to i32
    %c0_i32_9 = arith.constant 0 : i32
    %11 = arith.cmpi ne, %10, %c0_i32_9 : i32
    scf.if %11 {
      %c0_10 = arith.constant 0 : index
      %c0_11 = arith.constant 0 : index
      %12 = vector.load %arg7[%c0_10, %c0_11] : memref<16x32xf32, #tpu.memory_space<vmem>>, vector<16x32xf32>
      %c0_12 = arith.constant 0 : index
      %c0_13 = arith.constant 0 : index
      %13 = vector.load %arg5[%c0_12, %c0_13] : memref<1x32xf32, #tpu.memory_space<vmem>>, vector<1x32xf32>
      %14 = vector.broadcast %13 : vector<1x32xf32> to vector<16x32xf32>
      %15 = arith.addf %12, %14 : vector<16x32xf32>
      %16 = arith.truncf %15 : vector<16x32xf32> to vector<16x32xbf16>
      %c0_14 = arith.constant 0 : index
      %c0_15 = arith.constant 0 : index
      %17 = vector.load %arg6[%c0_14, %c0_15] : memref<16x32xbf16, #tpu.memory_space<vmem>>, vector<16x32xbf16>
      tpu.vector_store %arg6[%c0_14, %c0_15], %16 {strides = array<i32>} : memref<16x32xbf16, #tpu.memory_space<vmem>>, vector<16x32xbf16>,
    } else {
    }
    return
  }
  func.func @transform_0(%arg0: i32, %arg1: i32, %arg2: i32) -> (i32, i32) {
    %c0_i32 = arith.constant 0 : i32
    return %arg0, %arg2 : i32, i32
  }
  func.func @transform_1(%arg0: i32, %arg1: i32, %arg2: i32) -> (i32, i32) {
    %c0_i32 = arith.constant 0 : i32
    return %arg2, %arg1 : i32, i32
  }
  func.func @transform_2(%arg0: i32, %arg1: i32, %arg2: i32) -> (i32, i32) {
    %c0_i32 = arith.constant 0 : i32
    %c0_i32_0 = arith.constant 0 : i32
    return %c0_i32, %arg1 : i32, i32
  }
  func.func @transform_3(%arg0: i32, %arg1: i32, %arg2: i32) -> (i32, i32) {
    %c0_i32 = arith.constant 0 : i32
    return %arg0, %arg1 : i32, i32
  }
}

module attributes {stable_mosaic.version = 11 : i64} {
  func.func @_ln_residual_kernel(%arg0: i32, %arg1: memref<16x32xbf16, #tpu.memory_space<vmem>>, %arg2: memref<16x32xbf16, #tpu.memory_space<vmem>>, %arg3: memref<2x32xf32, #tpu.memory_space<vmem>>, %arg4: memref<16x32xbf16, #tpu.memory_space<vmem>>) attributes {dimension_semantics = [#tpu.dimension_semantics<parallel>], iteration_bounds = array<i64: 1>, scalar_prefetch = 0 : i64, scratch_operands = 0 : i64, tpu.core_type = #tpu.core_type<tc>, window_params = [{transform_indices = @transform_0, window_bounds = array<i64: 16, 32>}, {transform_indices = @transform_1, window_bounds = array<i64: 16, 32>}, {pipeline_mode = #tpu.pipeline_mode<synchronous>, transform_indices = @transform_2, window_bounds = array<i64: 2, 32>}, {transform_indices = @transform_3, window_bounds = array<i64: 16, 32>}]} {
    %c0 = arith.constant 0 : index
    %c0_0 = arith.constant 0 : index
    %0 = vector.load %arg1[%c0, %c0_0] : memref<16x32xbf16, #tpu.memory_space<vmem>>, vector<16x32xbf16>
    %1 = arith.extf %0 : vector<16x32xbf16> to vector<16x32xf32>
    %c0_1 = arith.constant 0 : index
    %c0_2 = arith.constant 0 : index
    %2 = vector.load %arg2[%c0_1, %c0_2] : memref<16x32xbf16, #tpu.memory_space<vmem>>, vector<16x32xbf16>
    %3 = arith.extf %2 : vector<16x32xbf16> to vector<16x32xf32>
    %4 = arith.addf %1, %3 : vector<16x32xf32>
    %cst = arith.constant dense<0.000000e+00> : vector<16xf32>
    %5 = vector.multi_reduction <add>, %4, %cst [1] : vector<16x32xf32> to vector<16xf32>
    %6 = vector.shape_cast %5 : vector<16xf32> to vector<16x1xf32>
    %cst_3 = arith.constant 3.200000e+01 : f32
    %7 = vector.broadcast %cst_3 : f32 to vector<16x1xf32>
    %8 = arith.divf %6, %7 : vector<16x1xf32>
    %9 = vector.broadcast %8 : vector<16x1xf32> to vector<16x32xf32>
    %10 = arith.subf %4, %9 : vector<16x32xf32>
    %11 = arith.mulf %10, %10 : vector<16x32xf32>
    %cst_4 = arith.constant dense<0.000000e+00> : vector<16xf32>
    %12 = vector.multi_reduction <add>, %11, %cst_4 [1] : vector<16x32xf32> to vector<16xf32>
    %13 = vector.shape_cast %12 : vector<16xf32> to vector<16x1xf32>
    %cst_5 = arith.constant 3.200000e+01 : f32
    %14 = vector.broadcast %cst_5 : f32 to vector<16x1xf32>
    %15 = arith.divf %13, %14 : vector<16x1xf32>
    %16 = vector.broadcast %8 : vector<16x1xf32> to vector<16x32xf32>
    %17 = arith.subf %4, %16 : vector<16x32xf32>
    %cst_6 = arith.constant 9.99999974E-6 : f32
    %18 = vector.broadcast %cst_6 : f32 to vector<16x1xf32>
    %19 = arith.addf %15, %18 : vector<16x1xf32>
    %20 = math.rsqrt %19 : vector<16x1xf32>
    %21 = vector.broadcast %20 : vector<16x1xf32> to vector<16x32xf32>
    %22 = arith.mulf %17, %21 : vector<16x32xf32>
    %c0_7 = arith.constant 0 : index
    %c0_8 = arith.constant 0 : index
    %23 = vector.load %arg3[%c0_7, %c0_8] : memref<2x32xf32, #tpu.memory_space<vmem>>, vector<1x32xf32>
    %24 = vector.broadcast %23 : vector<1x32xf32> to vector<16x32xf32>
    %25 = arith.mulf %22, %24 : vector<16x32xf32>
    %c1 = arith.constant 1 : index
    %c0_9 = arith.constant 0 : index
    %26 = vector.load %arg3[%c1, %c0_9] : memref<2x32xf32, #tpu.memory_space<vmem>>, vector<1x32xf32>
    %27 = vector.broadcast %26 : vector<1x32xf32> to vector<16x32xf32>
    %28 = arith.addf %25, %27 : vector<16x32xf32>
    %29 = arith.truncf %28 : vector<16x32xf32> to vector<16x32xbf16>
    %c0_10 = arith.constant 0 : index
    %c0_11 = arith.constant 0 : index
    %30 = vector.load %arg4[%c0_10, %c0_11] : memref<16x32xbf16, #tpu.memory_space<vmem>>, vector<16x32xbf16>
    tpu.vector_store %arg4[%c0_10, %c0_11], %29 {strides = array<i32>} : memref<16x32xbf16, #tpu.memory_space<vmem>>, vector<16x32xbf16>,
    return
  }
  func.func @transform_0(%arg0: i32) -> (i32, i32) {
    %c0_i32 = arith.constant 0 : i32
    %c0_i32_0 = arith.constant 0 : i32
    return %arg0, %c0_i32 : i32, i32
  }
  func.func @transform_1(%arg0: i32) -> (i32, i32) {
    %c0_i32 = arith.constant 0 : i32
    %c0_i32_0 = arith.constant 0 : i32
    return %arg0, %c0_i32 : i32, i32
  }
  func.func @transform_2(%arg0: i32) -> (i32, i32) {
    %c0_i32 = arith.constant 0 : i32
    %c0_i32_0 = arith.constant 0 : i32
    %c0_i32_1 = arith.constant 0 : i32
    return %c0_i32, %c0_i32_0 : i32, i32
  }
  func.func @transform_3(%arg0: i32) -> (i32, i32) {
    %c0_i32 = arith.constant 0 : i32
    %c0_i32_0 = arith.constant 0 : i32
    return %arg0, %c0_i32 : i32, i32
  }
}

module attributes {stable_mosaic.version = 11 : i64} {
  func.func @_matmul_bias_kernel(%arg0: i32, %arg1: i32, %arg2: i32, %arg3: memref<16x32xbf16, #tpu.memory_space<vmem>>, %arg4: memref<32x128xbf16, #tpu.memory_space<vmem>>, %arg5: memref<1x128xf32, #tpu.memory_space<vmem>>, %arg6: memref<16x128xbf16, #tpu.memory_space<vmem>>, %arg7: memref<16x128xf32, #tpu.memory_space<vmem>>) attributes {dimension_semantics = [#tpu.dimension_semantics<parallel>, #tpu.dimension_semantics<parallel>, #tpu.dimension_semantics<arbitrary>], iteration_bounds = array<i64: 1, 1, 1>, scalar_prefetch = 0 : i64, scratch_operands = 1 : i64, tpu.core_type = #tpu.core_type<tc>, window_params = [{transform_indices = @transform_0, window_bounds = array<i64: 16, 32>}, {transform_indices = @transform_1, window_bounds = array<i64: 32, 128>}, {transform_indices = @transform_2, window_bounds = array<i64: 1, 128>}, {transform_indices = @transform_3, window_bounds = array<i64: 16, 128>}]} {
    %c0_i32 = arith.constant 0 : i32
    %0 = arith.cmpi eq, %arg2, %c0_i32 : i32
    %1 = arith.extui %0 : i1 to i32
    %c0_i32_0 = arith.constant 0 : i32
    %2 = arith.cmpi ne, %1, %c0_i32_0 : i32
    scf.if %2 {
      %cst_10 = arith.constant 0.000000e+00 : f32
      %12 = vector.broadcast %cst_10 : f32 to vector<16x128xf32>
      %c0_11 = arith.constant 0 : index
      %c0_12 = arith.constant 0 : index
      %13 = vector.load %arg7[%c0_11, %c0_12] : memref<16x128xf32, #tpu.memory_space<vmem>>, vector<16x128xf32>
      tpu.vector_store %arg7[%c0_11, %c0_12], %12 {strides = array<i32>} : memref<16x128xf32, #tpu.memory_space<vmem>>, vector<16x128xf32>,
    } else {
    }
    %c0 = arith.constant 0 : index
    %c0_1 = arith.constant 0 : index
    %3 = vector.load %arg7[%c0, %c0_1] : memref<16x128xf32, #tpu.memory_space<vmem>>, vector<16x128xf32>
    %c0_2 = arith.constant 0 : index
    %c0_3 = arith.constant 0 : index
    %4 = vector.load %arg3[%c0_2, %c0_3] : memref<16x32xbf16, #tpu.memory_space<vmem>>, vector<16x32xbf16>
    %c0_4 = arith.constant 0 : index
    %c0_5 = arith.constant 0 : index
    %5 = vector.load %arg4[%c0_4, %c0_5] : memref<32x128xbf16, #tpu.memory_space<vmem>>, vector<32x128xbf16>
    %cst = arith.constant dense<0.000000e+00> : vector<16x128xf32>
    %6 = tpu.matmul %4, %5, %cst {dimension_numbers = #tpu.dot_dimension_numbers<[1], [0], [0], [1], [0, 0, 1, 1], [], []>} : vector<16x32xbf16>, vector<32x128xbf16>, vector<16x128xf32> -> vector<16x128xf32>
    %7 = arith.addf %3, %6 : vector<16x128xf32>
    %c0_6 = arith.constant 0 : index
    %c0_7 = arith.constant 0 : index
    %8 = vector.load %arg7[%c0_6, %c0_7] : memref<16x128xf32, #tpu.memory_space<vmem>>, vector<16x128xf32>
    tpu.vector_store %arg7[%c0_6, %c0_7], %7 {strides = array<i32>} : memref<16x128xf32, #tpu.memory_space<vmem>>, vector<16x128xf32>,
    %c0_i32_8 = arith.constant 0 : i32
    %9 = arith.cmpi eq, %arg2, %c0_i32_8 : i32
    %10 = arith.extui %9 : i1 to i32
    %c0_i32_9 = arith.constant 0 : i32
    %11 = arith.cmpi ne, %10, %c0_i32_9 : i32
    scf.if %11 {
      %c0_10 = arith.constant 0 : index
      %c0_11 = arith.constant 0 : index
      %12 = vector.load %arg7[%c0_10, %c0_11] : memref<16x128xf32, #tpu.memory_space<vmem>>, vector<16x128xf32>
      %c0_12 = arith.constant 0 : index
      %c0_13 = arith.constant 0 : index
      %13 = vector.load %arg5[%c0_12, %c0_13] : memref<1x128xf32, #tpu.memory_space<vmem>>, vector<1x128xf32>
      %14 = vector.broadcast %13 : vector<1x128xf32> to vector<16x128xf32>
      %15 = arith.addf %12, %14 : vector<16x128xf32>
      %16 = arith.mulf %15, %15 : vector<16x128xf32>
      %17 = arith.mulf %15, %16 : vector<16x128xf32>
      %cst_14 = arith.constant 4.471500e-02 : f32
      %18 = vector.broadcast %cst_14 : f32 to vector<16x128xf32>
      %19 = arith.mulf %18, %17 : vector<16x128xf32>
      %20 = arith.addf %15, %19 : vector<16x128xf32>
      %cst_15 = arith.constant 0.797884583 : f32
      %21 = vector.broadcast %cst_15 : f32 to vector<16x128xf32>
      %22 = arith.mulf %21, %20 : vector<16x128xf32>
      %23 = math.tanh %22 : vector<16x128xf32>
      %cst_16 = arith.constant 1.000000e+00 : f32
      %24 = vector.broadcast %cst_16 : f32 to vector<16x128xf32>
      %25 = arith.addf %24, %23 : vector<16x128xf32>
      %cst_17 = arith.constant 5.000000e-01 : f32
      %26 = vector.broadcast %cst_17 : f32 to vector<16x128xf32>
      %27 = arith.mulf %26, %25 : vector<16x128xf32>
      %28 = arith.mulf %15, %27 : vector<16x128xf32>
      %29 = arith.truncf %28 : vector<16x128xf32> to vector<16x128xbf16>
      %c0_18 = arith.constant 0 : index
      %c0_19 = arith.constant 0 : index
      %30 = vector.load %arg6[%c0_18, %c0_19] : memref<16x128xbf16, #tpu.memory_space<vmem>>, vector<16x128xbf16>
      tpu.vector_store %arg6[%c0_18, %c0_19], %29 {strides = array<i32>} : memref<16x128xbf16, #tpu.memory_space<vmem>>, vector<16x128xbf16>,
    } else {
    }
    return
  }
  func.func @transform_0(%arg0: i32, %arg1: i32, %arg2: i32) -> (i32, i32) {
    %c0_i32 = arith.constant 0 : i32
    return %arg0, %arg2 : i32, i32
  }
  func.func @transform_1(%arg0: i32, %arg1: i32, %arg2: i32) -> (i32, i32) {
    %c0_i32 = arith.constant 0 : i32
    return %arg2, %arg1 : i32, i32
  }
  func.func @transform_2(%arg0: i32, %arg1: i32, %arg2: i32) -> (i32, i32) {
    %c0_i32 = arith.constant 0 : i32
    %c0_i32_0 = arith.constant 0 : i32
    return %c0_i32, %arg1 : i32, i32
  }
  func.func @transform_3(%arg0: i32, %arg1: i32, %arg2: i32) -> (i32, i32) {
    %c0_i32 = arith.constant 0 : i32
    return %arg0, %arg1 : i32, i32
  }
}

module attributes {stable_mosaic.version = 11 : i64} {
  func.func @_matmul_bias_kernel(%arg0: i32, %arg1: i32, %arg2: i32, %arg3: memref<16x32xbf16, #tpu.memory_space<vmem>>, %arg4: memref<32x64xbf16, #tpu.memory_space<vmem>>, %arg5: memref<1x64xf32, #tpu.memory_space<vmem>>, %arg6: memref<16x64xf32, #tpu.memory_space<vmem>>, %arg7: memref<16x64xf32, #tpu.memory_space<vmem>>) attributes {dimension_semantics = [#tpu.dimension_semantics<parallel>, #tpu.dimension_semantics<parallel>, #tpu.dimension_semantics<arbitrary>], iteration_bounds = array<i64: 1, 1, 1>, scalar_prefetch = 0 : i64, scratch_operands = 1 : i64, tpu.core_type = #tpu.core_type<tc>, window_params = [{transform_indices = @transform_0, window_bounds = array<i64: 16, 32>}, {transform_indices = @transform_1, window_bounds = array<i64: 32, 64>}, {transform_indices = @transform_2, window_bounds = array<i64: 1, 64>}, {transform_indices = @transform_3, window_bounds = array<i64: 16, 64>}]} {
    %c0_i32 = arith.constant 0 : i32
    %0 = arith.cmpi eq, %arg2, %c0_i32 : i32
    %1 = arith.extui %0 : i1 to i32
    %c0_i32_0 = arith.constant 0 : i32
    %2 = arith.cmpi ne, %1, %c0_i32_0 : i32
    scf.if %2 {
      %cst_10 = arith.constant 0.000000e+00 : f32
      %12 = vector.broadcast %cst_10 : f32 to vector<16x64xf32>
      %c0_11 = arith.constant 0 : index
      %c0_12 = arith.constant 0 : index
      %13 = vector.load %arg7[%c0_11, %c0_12] : memref<16x64xf32, #tpu.memory_space<vmem>>, vector<16x64xf32>
      tpu.vector_store %arg7[%c0_11, %c0_12], %12 {strides = array<i32>} : memref<16x64xf32, #tpu.memory_space<vmem>>, vector<16x64xf32>,
    } else {
    }
    %c0 = arith.constant 0 : index
    %c0_1 = arith.constant 0 : index
    %3 = vector.load %arg7[%c0, %c0_1] : memref<16x64xf32, #tpu.memory_space<vmem>>, vector<16x64xf32>
    %c0_2 = arith.constant 0 : index
    %c0_3 = arith.constant 0 : index
    %4 = vector.load %arg3[%c0_2, %c0_3] : memref<16x32xbf16, #tpu.memory_space<vmem>>, vector<16x32xbf16>
    %c0_4 = arith.constant 0 : index
    %c0_5 = arith.constant 0 : index
    %5 = vector.load %arg4[%c0_4, %c0_5] : memref<32x64xbf16, #tpu.memory_space<vmem>>, vector<32x64xbf16>
    %cst = arith.constant dense<0.000000e+00> : vector<16x64xf32>
    %6 = tpu.matmul %4, %5, %cst {dimension_numbers = #tpu.dot_dimension_numbers<[1], [0], [0], [1], [0, 0, 1, 1], [], []>} : vector<16x32xbf16>, vector<32x64xbf16>, vector<16x64xf32> -> vector<16x64xf32>
    %7 = arith.addf %3, %6 : vector<16x64xf32>
    %c0_6 = arith.constant 0 : index
    %c0_7 = arith.constant 0 : index
    %8 = vector.load %arg7[%c0_6, %c0_7] : memref<16x64xf32, #tpu.memory_space<vmem>>, vector<16x64xf32>
    tpu.vector_store %arg7[%c0_6, %c0_7], %7 {strides = array<i32>} : memref<16x64xf32, #tpu.memory_space<vmem>>, vector<16x64xf32>,
    %c0_i32_8 = arith.constant 0 : i32
    %9 = arith.cmpi eq, %arg2, %c0_i32_8 : i32
    %10 = arith.extui %9 : i1 to i32
    %c0_i32_9 = arith.constant 0 : i32
    %11 = arith.cmpi ne, %10, %c0_i32_9 : i32
    scf.if %11 {
      %c0_10 = arith.constant 0 : index
      %c0_11 = arith.constant 0 : index
      %12 = vector.load %arg7[%c0_10, %c0_11] : memref<16x64xf32, #tpu.memory_space<vmem>>, vector<16x64xf32>
      %c0_12 = arith.constant 0 : index
      %c0_13 = arith.constant 0 : index
      %13 = vector.load %arg5[%c0_12, %c0_13] : memref<1x64xf32, #tpu.memory_space<vmem>>, vector<1x64xf32>
      %14 = vector.broadcast %13 : vector<1x64xf32> to vector<16x64xf32>
      %15 = arith.addf %12, %14 : vector<16x64xf32>
      %c0_14 = arith.constant 0 : index
      %c0_15 = arith.constant 0 : index
      %16 = vector.load %arg6[%c0_14, %c0_15] : memref<16x64xf32, #tpu.memory_space<vmem>>, vector<16x64xf32>
      tpu.vector_store %arg6[%c0_14, %c0_15], %15 {strides = array<i32>} : memref<16x64xf32, #tpu.memory_space<vmem>>, vector<16x64xf32>,
    } else {
    }
    return
  }
  func.func @transform_0(%arg0: i32, %arg1: i32, %arg2: i32) -> (i32, i32) {
    %c0_i32 = arith.constant 0 : i32
    return %arg0, %arg2 : i32, i32
  }
  func.func @transform_1(%arg0: i32, %arg1: i32, %arg2: i32) -> (i32, i32) {
    %c0_i32 = arith.constant 0 : i32
    return %arg2, %arg1 : i32, i32
  }
  func.func @transform_2(%arg0: i32, %arg1: i32, %arg2: i32) -> (i32, i32) {
    %c0_i32 = arith.constant 0 : i32
    %c0_i32_0 = arith.constant 0 : i32
    return %c0_i32, %arg1 : i32, i32
  }
  func.func @transform_3(%arg0: i32, %arg1: i32, %arg2: i32) -> (i32, i32) {
    %c0_i32 = arith.constant 0 : i32
    return %arg0, %arg1 : i32, i32
  }
}

module attributes {stable_mosaic.version = 11 : i64} {
  func.func @_matmul_bias_kernel(%arg0: i32, %arg1: i32, %arg2: i32, %arg3: memref<16x128xbf16, #tpu.memory_space<vmem>>, %arg4: memref<128x32xbf16, #tpu.memory_space<vmem>>, %arg5: memref<1x32xf32, #tpu.memory_space<vmem>>, %arg6: memref<16x32xbf16, #tpu.memory_space<vmem>>, %arg7: memref<16x32xf32, #tpu.memory_space<vmem>>) attributes {dimension_semantics = [#tpu.dimension_semantics<parallel>, #tpu.dimension_semantics<parallel>, #tpu.dimension_semantics<arbitrary>], iteration_bounds = array<i64: 1, 1, 1>, scalar_prefetch = 0 : i64, scratch_operands = 1 : i64, tpu.core_type = #tpu.core_type<tc>, window_params = [{transform_indices = @transform_0, window_bounds = array<i64: 16, 128>}, {transform_indices = @transform_1, window_bounds = array<i64: 128, 32>}, {transform_indices = @transform_2, window_bounds = array<i64: 1, 32>}, {transform_indices = @transform_3, window_bounds = array<i64: 16, 32>}]} {
    %c0_i32 = arith.constant 0 : i32
    %0 = arith.cmpi eq, %arg2, %c0_i32 : i32
    %1 = arith.extui %0 : i1 to i32
    %c0_i32_0 = arith.constant 0 : i32
    %2 = arith.cmpi ne, %1, %c0_i32_0 : i32
    scf.if %2 {
      %cst_10 = arith.constant 0.000000e+00 : f32
      %12 = vector.broadcast %cst_10 : f32 to vector<16x32xf32>
      %c0_11 = arith.constant 0 : index
      %c0_12 = arith.constant 0 : index
      %13 = vector.load %arg7[%c0_11, %c0_12] : memref<16x32xf32, #tpu.memory_space<vmem>>, vector<16x32xf32>
      tpu.vector_store %arg7[%c0_11, %c0_12], %12 {strides = array<i32>} : memref<16x32xf32, #tpu.memory_space<vmem>>, vector<16x32xf32>,
    } else {
    }
    %c0 = arith.constant 0 : index
    %c0_1 = arith.constant 0 : index
    %3 = vector.load %arg7[%c0, %c0_1] : memref<16x32xf32, #tpu.memory_space<vmem>>, vector<16x32xf32>
    %c0_2 = arith.constant 0 : index
    %c0_3 = arith.constant 0 : index
    %4 = vector.load %arg3[%c0_2, %c0_3] : memref<16x128xbf16, #tpu.memory_space<vmem>>, vector<16x128xbf16>
    %c0_4 = arith.constant 0 : index
    %c0_5 = arith.constant 0 : index
    %5 = vector.load %arg4[%c0_4, %c0_5] : memref<128x32xbf16, #tpu.memory_space<vmem>>, vector<128x32xbf16>
    %cst = arith.constant dense<0.000000e+00> : vector<16x32xf32>
    %6 = tpu.matmul %4, %5, %cst {dimension_numbers = #tpu.dot_dimension_numbers<[1], [0], [0], [1], [0, 0, 1, 1], [], []>} : vector<16x128xbf16>, vector<128x32xbf16>, vector<16x32xf32> -> vector<16x32xf32>
    %7 = arith.addf %3, %6 : vector<16x32xf32>
    %c0_6 = arith.constant 0 : index
    %c0_7 = arith.constant 0 : index
    %8 = vector.load %arg7[%c0_6, %c0_7] : memref<16x32xf32, #tpu.memory_space<vmem>>, vector<16x32xf32>
    tpu.vector_store %arg7[%c0_6, %c0_7], %7 {strides = array<i32>} : memref<16x32xf32, #tpu.memory_space<vmem>>, vector<16x32xf32>,
    %c0_i32_8 = arith.constant 0 : i32
    %9 = arith.cmpi eq, %arg2, %c0_i32_8 : i32
    %10 = arith.extui %9 : i1 to i32
    %c0_i32_9 = arith.constant 0 : i32
    %11 = arith.cmpi ne, %10, %c0_i32_9 : i32
    scf.if %11 {
      %c0_10 = arith.constant 0 : index
      %c0_11 = arith.constant 0 : index
      %12 = vector.load %arg7[%c0_10, %c0_11] : memref<16x32xf32, #tpu.memory_space<vmem>>, vector<16x32xf32>
      %c0_12 = arith.constant 0 : index
      %c0_13 = arith.constant 0 : index
      %13 = vector.load %arg5[%c0_12, %c0_13] : memref<1x32xf32, #tpu.memory_space<vmem>>, vector<1x32xf32>
      %14 = vector.broadcast %13 : vector<1x32xf32> to vector<16x32xf32>
      %15 = arith.addf %12, %14 : vector<16x32xf32>
      %16 = arith.truncf %15 : vector<16x32xf32> to vector<16x32xbf16>
      %c0_14 = arith.constant 0 : index
      %c0_15 = arith.constant 0 : index
      %17 = vector.load %arg6[%c0_14, %c0_15] : memref<16x32xbf16, #tpu.memory_space<vmem>>, vector<16x32xbf16>
      tpu.vector_store %arg6[%c0_14, %c0_15], %16 {strides = array<i32>} : memref<16x32xbf16, #tpu.memory_space<vmem>>, vector<16x32xbf16>,
    } else {
    }
    return
  }
  func.func @transform_0(%arg0: i32, %arg1: i32, %arg2: i32) -> (i32, i32) {
    %c0_i32 = arith.constant 0 : i32
    return %arg0, %arg2 : i32, i32
  }
  func.func @transform_1(%arg0: i32, %arg1: i32, %arg2: i32) -> (i32, i32) {
    %c0_i32 = arith.constant 0 : i32
    return %arg2, %arg1 : i32, i32
  }
  func.func @transform_2(%arg0: i32, %arg1: i32, %arg2: i32) -> (i32, i32) {
    %c0_i32 = arith.constant 0 : i32
    %c0_i32_0 = arith.constant 0 : i32
    return %c0_i32, %arg1 : i32, i32
  }
  func.func @transform_3(%arg0: i32, %arg1: i32, %arg2: i32) -> (i32, i32) {
    %c0_i32 = arith.constant 0 : i32
    return %arg0, %arg1 : i32, i32
  }
}

</mosaic_0001>

<llo_original>
// kernel: gpt_forward.15
$region0: #{gpt_forward.15}
  #allocation0 [shape = 'u32[]', space=smem, size = 0x4, offset = 0x4, fixed_abs, tag = 'smem constant byte address 0x4 - core index']
  #allocation1 [shape = 'u32[144,128]{1,0:T(1,128)}', space=vmem, size = 0x12000, scoped, tag = 'internal scratch']
  #allocation2 [shape = 'f32[16,96]{1,0:T(8,128)}', space=vmem, size = 0x2000, scoped, tag = 'scratch operand']
  %s0 = inlined_call_operand.vmem [shape: bf16[16,32], index: 0, kind: input, shape index: {}]
  %s1 = inlined_call_operand.vmem [shape: bf16[32,96], index: 1, kind: input, shape index: {}]
  %s2 = inlined_call_operand.vmem [shape: f32[1,96], index: 2, kind: input, shape index: {}]
  %s3 = inlined_call_operand.vmem [shape: bf16[16,96], index: 3, kind: output, shape index: {}]
  %s4 = sld [smem:[#allocation0]]
  $region30: #{gpt_forward.15} parent=0
    _
  %s6 = ssub.s32 1, %s4
  %s7 = scalar_select 0, %s6, %s4
  // Predicated region
  $region2: #{gpt_forward.15} parent=0 // pred_check
    _
  $region3: #{gpt_forward.15} parent=0 // pred_check_branch
    %9 = sbr.rel (0) target = $region5
  $region4: #{gpt_forward.15} parent=0 // pred_region
    _
  $region5: #{gpt_forward.15} parent=0 // pred_fallthru
    _
  // Predicated region
  $region6: #{gpt_forward.15} parent=0 // pred_check
    _
  $region7: #{gpt_forward.15} parent=0 // pred_check_branch
    %11 = sbr.rel (0) target = $region9
  $region8: #{gpt_forward.15} parent=0 // pred_region
    _
  $region9: #{gpt_forward.15} parent=0 // pred_fallthru
    _
  // Predicated region
  $region10: #{gpt_forward.15} parent=0 // pred_check
    _
  $region11: #{gpt_forward.15} parent=0 // pred_check_branch
    %13 = sbr.rel (0) target = $region13
  $region12: #{gpt_forward.15} parent=0 // pred_region
    _
  $region13: #{gpt_forward.15} parent=0 // pred_fallthru
    _
  %p15 = scmp.eq.s32.totalorder 0, 0
  // Predicated region
  $region14: #{gpt_forward.15} parent=0 // pred_check
    %p16 = pneg %p15
  $region15: #{gpt_forward.15} parent=0 // pred_check_branch
    %18 = sbr.rel (%p16) target = $region17
  $region16: #{gpt_forward.15} parent=0 // pred_region
    %vm19 = vcmask 785408
    %20 = vst.msk [vmem:[#allocation2] sm:$0xff] %vm19, 0.0
    %21 = vst.msk [vmem:[#allocation2 + $0x8] sm:$0xff] %vm19, 0.0
  $region17: #{gpt_forward.15} parent=0 // pred_fallthru
    _
  %v22 = vld [vmem:[#allocation2] sm:$0xff]
  %v23 = vld [vmem:[#allocation2 + $0x8] sm:$0xff]
  %v24 = vld [vmem:[%s0] sm:$0xf]
  %v25 = vld [vmem:[%s0 + $0x4] sm:$0xf]
  %v26 = vld [vmem:[%s1] sm:$0xf]
  %v27 = vld [vmem:[%s1 + $0x4] sm:$0xf]
  %v28 = vld [vmem:[%s1 + $0x8] sm:$0xf]
  %v29 = vld [vmem:[%s1 + $0xc] sm:$0xf]
  %v32 = vunpack.c.l.b16 %v24
  %v33 = vunpack.c.l.b16 %v25
  %v34 = vpack.c.b16 %v33, %v32
  %v39 = vunpack.c.l.b16 %v26
  %v40 = vunpack.c.l.b16 %v27
  %v41 = vunpack.c.l.b16 %v28
  %v42 = vunpack.c.l.b16 %v29
  %v43 = vpack.c.b16 %v40, %v39
  %v44 = vpack.c.b16 %v42, %v41
  %vm47 = vcmask 261120
  %v49 = vsel %vm47, %v34, 0
  %51 = vmatprep.subr.bf16.mxu0 0
  %52 = vmatpush1.bf16.msra.mxu0 %v43
  %53 = vmatprep.subr.bf16.mxu0 0
  %54 = vmatpush1.bf16.msra.mxu0 %v44
  %55 = vmatprep.subr.bf16.mxu0 0
  %56 = vmatpush1.bf16.msra.mxu0 0
  %57 = vmatprep.subr.bf16.mxu0 0
  %58 = vmatpush1.bf16.msra.mxu0 0
  %59 = vmatprep.subr.bf16.mxu0 0
  %60 = vmatpush1.bf16.msra.mxu0 0
  %61 = vmatprep.subr.bf16.mxu0 0
  %62 = vmatpush1.bf16.msra.mxu0 0
  %63 = vmatprep.subr.bf16.mxu0 0
  %64 = vmatpush1.bf16.msra.mxu0 0
  %65 = vmatprep.subr.bf16.mxu0 0
  %66 = vmatpush1.bf16.msra.mxu0 0
  %67 = vmatprep.subr.bf16.mxu0 0
  %68 = vmatpush1.bf16.msra.mxu0 0
  %69 = vmatprep.subr.bf16.mxu0 0
  %70 = vmatpush1.bf16.msra.mxu0 0
  %71 = vmatprep.subr.bf16.mxu0 0
  %72 = vmatpush1.bf16.msra.mxu0 0
  %73 = vmatprep.subr.bf16.mxu0 0
  %74 = vmatpush1.bf16.msra.mxu0 0
  %75 = vmatprep.subr.bf16.mxu0 0
  %76 = vmatpush1.bf16.msra.mxu0 0
  %77 = vmatprep.subr.bf16.mxu0 0
  %78 = vmatpush1.bf16.msra.mxu0 0
  %79 = vmatprep.subr.bf16.mxu0 0
  %80 = vmatpush1.bf16.msra.mxu0 0
  %81 = vmatprep.subr.bf16.mxu0 0
  %82 = vmatpush1.bf16.msra.mxu0 0
  %83 = vmatprep.mubr.bf16.mxu0 0
  %84 = vmatmul.mubr.bf16.gmra.mrb[0].mxu0 %v49
  %v85 = vpop.f32.mrb[0].mxu0
  %v86 = vadd.f32 0.0, %v85
  %v87 = vpop.f32.mrb[0].mxu0
  %v88 = vpop.f32.mrb[0].mxu0
  %v89 = vadd.f32 0.0, %v88
  %v90 = vpop.f32.mrb[0].mxu0
  %91 = vdwg.mxu0
  %v92 = vadd.f32 %v22, %v86
  %v93 = vadd.f32 %v23, %v89
  %vm94 = vcmask 785408
  %95 = vst.msk [vmem:[#allocation2] sm:$0xff] %vm94, %v92
  %96 = vst.msk [vmem:[#allocation2 + $0x8] sm:$0xff] %vm94, %v93
  // Predicated region
  $region18: #{gpt_forward.15} parent=0 // pred_check
    %p97 = pneg %p15
  $region19: #{gpt_forward.15} parent=0 // pred_check_branch
    %99 = sbr.rel (%p97) target = $region21
  $region20: #{gpt_forward.15} parent=0 // pred_region
    %v100 = vld [vmem:[#allocation2] sm:$0xff]
    %v101 = vld [vmem:[#allocation2 + $0x8] sm:$0xff]
    %v102 = vld [vmem:[%s2] sm:$0x1]
    %v104 = vlaneseq
    %v105 = vshrl.u32 %v104, 7
    %v106 = vsub.s32 0, %v105
    %v107 = vrot.slane %v102, %v106
    %v109 = vadd.f32 %v100, %v107
    %v110 = vadd.f32 %v101, %v107
    %v111 = vpack.c.bf16 %v110, %v109
    %v113 = vunpack.c.l.b16 %v111
    %v114 = vunpack.c.h.b16 %v111
    %v115 = vpack.c.b16 %v113, %v113
    %v116 = vpack.c.b16 %v114, %v114
    %vm119 = vcmask 781312
    %120 = vst.msk [vmem:[%s3] sm:$0xf] %vm119, %v115
    %121 = vst.msk [vmem:[%s3 + $0x4] sm:$0xf] %vm119, %v116
  $region21: #{gpt_forward.15} parent=0 // pred_fallthru
    _
  // Predicated region
  $region22: #{gpt_forward.15} parent=0 // pred_check
    _
  $region23: #{gpt_forward.15} parent=0 // pred_check_branch
    %123 = sbr.rel (0) target = $region25
  $region24: #{gpt_forward.15} parent=0 // pred_region
    _
  $region25: #{gpt_forward.15} parent=0 // pred_fallthru
    _
  // Predicated region
  $region26: #{gpt_forward.15} parent=0 // pred_check
    _
  $region27: #{gpt_forward.15} parent=0 // pred_check_branch
    %125 = sbr.rel (0) target = $region29
  $region28: #{gpt_forward.15} parent=0 // pred_region
    _
  $region29: #{gpt_forward.15} parent=0 // pred_fallthru
    _

// kernel: gpt_forward.16
$region0: #{gpt_forward.16}
  #allocation0 [shape = 'u32[]', space=smem, size = 0x4, offset = 0x4, fixed_abs, tag = 'smem constant byte address 0x4 - core index']
  #allocation1 [shape = 'u32[144,128]{1,0:T(1,128)}', space=vmem, size = 0x12000, scoped, tag = 'internal scratch']
  %s0 = inlined_call_operand.vmem [shape: bf16[2,4,8,8], index: 0, kind: input, shape index: {}]
  %s1 = inlined_call_operand.vmem [shape: bf16[2,4,8,8], index: 1, kind: input, shape index: {}]
  %s2 = inlined_call_operand.vmem [shape: bf16[2,4,8,8], index: 2, kind: input, shape index: {}]
  %s3 = inlined_call_operand.vmem [shape: f32[2,1,8], index: 3, kind: input, shape index: {}]
  %s4 = inlined_call_operand.vmem [shape: bf16[2,4,8,8], index: 4, kind: output, shape index: {}]
  %s5 = sld [smem:[#allocation0]]
  $region49: #{gpt_forward.16} parent=0
    _
  %s7 = ssub.s32 1, %s5
  %s8 = scalar_select 0, %s7, %s5
  loop: start=0, step=1, limit=10
  $region2: #{gpt_forward.16} parent=0 // loop_pre_header
    _
  $region3: #{gpt_forward.16} parent=0 // loop_header
    %s10 = sphi 0, %s14
    %p11 = scmp.ge.s32.totalorder %s10, 10
    %s17 = sphi 0, %s29
    %s18 = sphi 0, %s25
    %s19 = sphi 0, %s17
    %s20 = sphi 0, %s18
    %s21 = sphi 0, %s19
    %s22 = sphi 0, %s20
    %s34 = sphi 0, %s36
    %s37 = sphi 0, %s34
    %s38 = sphi 0, %s37
    %s54 = sphi 0, %s38
    %s62 = sphi 0, %s64
    %s65 = sphi 0, %s62
    %s66 = sphi 0, %s65
    %s82 = sphi 0, %s66
    %s90 = sphi 0, %s92
    %s93 = sphi 0, %s90
    %s94 = sphi 0, %s93
    %s110 = sphi 0, %s94
    %s116 = sphi 0, %s118
    %s119 = sphi 0, %s116
    %s120 = sphi 0, %s119
    %s136 = sphi 0, %s120
    %s144 = sphi 0, %s146
    %s147 = sphi 0, %s144
    %s148 = sphi 0, %s147
    %s164 = sphi 0, %s148
  $region4: #{gpt_forward.16} parent=0 // loop_header_branch
    %13 = sbr.rel (%p11) target = $region8
  $region5: #{gpt_forward.16} parent=0 // loop_body
    %s15 = ssub.s32 %s10, 1
    %s16 = ssub.s32 %s10, 2
    %s23 = sadd.s32 1, %s18
    %p24 = scmp.ge.s32.totalorder %s23, 4
    %s25 = scalar_select %p24, 0, %s23
    %s26 = sadd.s32 1, %s17
    %s27 = scalar_select %p24, %s26, %s17
    %p28 = scmp.ge.s32.totalorder %s27, 2
    %s29 = scalar_select %p28, 0, %s27
    %s30 = ssub.s32 %s17, %s29
    %s31 = ssub.s32 %s18, %s25
    %s32 = sor.u32 %s30, %s31
    %p33 = scmp.eq.s32.totalorder %s32, 0
    %s35 = sadd.s32 %s34, 1
    %s36 = scalar_select %p33, %s34, %s35
    %p39 = pneg %p33
    %p40 = scmp.eq.s32.totalorder %s10, 7
    %p41 = por %p39, %p40
    %p42 = scmp.ne.s32.totalorder %s34, %s37
    %p43 = scmp.eq.s32.totalorder %s10, 0
    %p44 = por %p42, %p43
    %p45 = scmp.ne.s32.totalorder %s34, %s37
    %p46 = scmp.eq.s32.totalorder %s15, 7
    %p47 = por %p45, %p46
    %p48 = scmp.ne.s32.totalorder %s37, %s38
    %p49 = scmp.eq.s32.totalorder %s15, 0
    %p50 = por %p48, %p49
    %p51 = scmp.ne.s32.totalorder %s37, %s38
    %p52 = scmp.eq.s32.totalorder %s16, 7
    %p53 = por %p51, %p52
    %p55 = scmp.ne.s32.totalorder %s38, %s54
    %p56 = scmp.eq.s32.totalorder %s16, 0
    %p57 = por %p55, %p56
    %s58 = ssub.s32 %s17, %s29
    %s59 = ssub.s32 %s18, %s25
    %s60 = sor.u32 %s58, %s59
    %p61 = scmp.eq.s32.totalorder %s60, 0
    %s63 = sadd.s32 %s62, 1
    %s64 = scalar_select %p61, %s62, %s63
    %p67 = pneg %p61
    %p68 = scmp.eq.s32.totalorder %s10, 7
    %p69 = por %p67, %p68
    %p70 = scmp.ne.s32.totalorder %s62, %s65
    %p71 = scmp.eq.s32.totalorder %s10, 0
    %p72 = por %p70, %p71
    %p73 = scmp.ne.s32.totalorder %s62, %s65
    %p74 = scmp.eq.s32.totalorder %s15, 7
    %p75 = por %p73, %p74
    %p76 = scmp.ne.s32.totalorder %s65, %s66
    %p77 = scmp.eq.s32.totalorder %s15, 0
    %p78 = por %p76, %p77
    %p79 = scmp.ne.s32.totalorder %s65, %s66
    %p80 = scmp.eq.s32.totalorder %s16, 7
    %p81 = por %p79, %p80
    %p83 = scmp.ne.s32.totalorder %s66, %s82
    %p84 = scmp.eq.s32.totalorder %s16, 0
    %p85 = por %p83, %p84
    %s86 = ssub.s32 %s17, %s29
    %s87 = ssub.s32 %s18, %s25
    %s88 = sor.u32 %s86, %s87
    %p89 = scmp.eq.s32.totalorder %s88, 0
    %s91 = sadd.s32 %s90, 1
    %s92 = scalar_select %p89, %s90, %s91
    %p95 = pneg %p89
    %p96 = scmp.eq.s32.totalorder %s10, 7
    %p97 = por %p95, %p96
    %p98 = scmp.ne.s32.totalorder %s90, %s93
    %p99 = scmp.eq.s32.totalorder %s10, 0
    %p100 = por %p98, %p99
    %p101 = scmp.ne.s32.totalorder %s90, %s93
    %p102 = scmp.eq.s32.totalorder %s15, 7
    %p103 = por %p101, %p102
    %p104 = scmp.ne.s32.totalorder %s93, %s94
    %p105 = scmp.eq.s32.totalorder %s15, 0
    %p106 = por %p104, %p105
    %p107 = scmp.ne.s32.totalorder %s93, %s94
    %p108 = scmp.eq.s32.totalorder %s16, 7
    %p109 = por %p107, %p108
    %p111 = scmp.ne.s32.totalorder %s94, %s110
    %p112 = scmp.eq.s32.totalorder %s16, 0
    %p113 = por %p111, %p112
    %s114 = ssub.s32 %s17, %s29
    %p115 = scmp.eq.s32.totalorder %s114, 0
    %s117 = sadd.s32 %s116, 1
    %s118 = scalar_select %p115, %s116, %s117
    %p121 = pneg %p115
    %p122 = scmp.eq.s32.totalorder %s10, 7
    %p123 = por %p121, %p122
    %p124 = scmp.ne.s32.totalorder %s116, %s119
    %p125 = scmp.eq.s32.totalorder %s10, 0
    %p126 = por %p124, %p125
    %p127 = scmp.ne.s32.totalorder %s116, %s119
    %p128 = scmp.eq.s32.totalorder %s15, 7
    %p129 = por %p127, %p128
    %p130 = scmp.ne.s32.totalorder %s119, %s120
    %p131 = scmp.eq.s32.totalorder %s15, 0
    %p132 = por %p130, %p131
    %p133 = scmp.ne.s32.totalorder %s119, %s120
    %p134 = scmp.eq.s32.totalorder %s16, 7
    %p135 = por %p133, %p134
    %p137 = scmp.ne.s32.totalorder %s120, %s136
    %p138 = scmp.eq.s32.totalorder %s16, 0
    %p139 = por %p137, %p138
    %s140 = ssub.s32 %s17, %s29
    %s141 = ssub.s32 %s18, %s25
    %s142 = sor.u32 %s140, %s141
    %p143 = scmp.eq.s32.totalorder %s142, 0
    %s145 = sadd.s32 %s144, 1
    %s146 = scalar_select %p143, %s144, %s145
    %p149 = pneg %p143
    %p150 = scmp.eq.s32.totalorder %s10, 7
    %p151 = por %p149, %p150
    %p152 = scmp.ne.s32.totalorder %s144, %s147
    %p153 = scmp.eq.s32.totalorder %s10, 0
    %p154 = por %p152, %p153
    %p155 = scmp.ne.s32.totalorder %s144, %s147
    %p156 = scmp.eq.s32.totalorder %s15, 7
    %p157 = por %p155, %p156
    %p158 = scmp.ne.s32.totalorder %s147, %s148
    %p159 = scmp.eq.s32.totalorder %s15, 0
    %p160 = por %p158, %p159
    %p161 = scmp.ne.s32.totalorder %s147, %s148
    %p162 = scmp.eq.s32.totalorder %s16, 7
    %p163 = por %p161, %p162
    %p165 = scmp.ne.s32.totalorder %s148, %s164
    %p166 = scmp.eq.s32.totalorder %s16, 0
    %p167 = por %p165, %p166
    %p168 = scmp.le.s32.totalorder 1, %s10
    %p169 = scmp.lt.s32.totalorder %s10, 9
    %p170 = pnand %p168, %p169
    %p171 = pneg %p170
    // Predicated region
    $region9: #{gpt_forward.16} parent=5 // pred_check
      _
    $region10: #{gpt_forward.16} parent=5 // pred_check_branch
      %173 = sbr.rel (%p170) target = $region12
    $region11: #{gpt_forward.16} parent=5 // pred_region
      %s174 = ssub.s32 %s10, 1
    $region12: #{gpt_forward.16} parent=5 // pred_fallthru
      _
    %p175 = scmp.lt.s32.totalorder %s10, 8
    // Predicated region
    $region13: #{gpt_forward.16} parent=5 // pred_check
      %p176 = pneg %p175
    $region14: #{gpt_forward.16} parent=5 // pred_check_branch
      %178 = sbr.rel (%p176) target = $region16
    $region15: #{gpt_forward.16} parent=5 // pred_region
      // Predicated region
      $region17: #{gpt_forward.16} parent=15 // pred_check
        %p179 = pneg %p44
      $region18: #{gpt_forward.16} parent=15 // pred_check_branch
        %181 = sbr.rel (%p179) target = $region20
      $region19: #{gpt_forward.16} parent=15 // pred_region
        %p182 = scmp.lt.s32.totalorder %s17, 1
        %s183 = scalar_select %p182, %s17, 1
        %p184 = scmp.lt.s32.totalorder %s18, 3
        %s185 = scalar_select %p184, %s18, 3
        %s186 = smul.addr %s183, 4
        %s187 = sadd.s32 %s185, %s186
        %s188 = smul.addr %s187, 4
        %s189 = scalar_lea.vmem %s0, %s188
      $region20: #{gpt_forward.16} parent=15 // pred_fallthru
        _
      // Predicated region
      $region21: #{gpt_forward.16} parent=15 // pred_check
        %p190 = pneg %p72
      $region22: #{gpt_forward.16} parent=15 // pred_check_branch
        %192 = sbr.rel (%p190) target = $region24
      $region23: #{gpt_forward.16} parent=15 // pred_region
        %p193 = scmp.lt.s32.totalorder %s17, 1
        %s194 = scalar_select %p193, %s17, 1
        %p195 = scmp.lt.s32.totalorder %s18, 3
        %s196 = scalar_select %p195, %s18, 3
        %s197 = smul.addr %s194, 4
        %s198 = sadd.s32 %s196, %s197
        %s199 = smul.addr %s198, 4
        %s200 = scalar_lea.vmem %s1, %s199
      $region24: #{gpt_forward.16} parent=15 // pred_fallthru
        _
      // Predicated region
      $region25: #{gpt_forward.16} parent=15 // pred_check
        %p201 = pneg %p100
      $region26: #{gpt_forward.16} parent=15 // pred_check_branch
        %203 = sbr.rel (%p201) target = $region28
      $region27: #{gpt_forward.16} parent=15 // pred_region
        %p204 = scmp.lt.s32.totalorder %s17, 1
        %s205 = scalar_select %p204, %s17, 1
        %p206 = scmp.lt.s32.totalorder %s18, 3
        %s207 = scalar_select %p206, %s18, 3
        %s208 = smul.addr %s205, 4
        %s209 = sadd.s32 %s207, %s208
        %s210 = smul.addr %s209, 4
        %s211 = scalar_lea.vmem %s2, %s210
      $region28: #{gpt_forward.16} parent=15 // pred_fallthru
        _
      // Predicated region
      $region29: #{gpt_forward.16} parent=15 // pred_check
        %p212 = pneg %p126
      $region30: #{gpt_forward.16} parent=15 // pred_check_branch
        %214 = sbr.rel (%p212) target = $region32
      $region31: #{gpt_forward.16} parent=15 // pred_region
        %p215 = scmp.lt.s32.totalorder %s17, 1
        %s216 = scalar_select %p215, %s17, 1
        %s217 = scalar_lea.vmem %s3, %s216
      $region32: #{gpt_forward.16} parent=15 // pred_fallthru
        _
    $region16: #{gpt_forward.16} parent=5 // pred_fallthru
      _
    %p218 = scmp.le.s32.totalorder 1, %s10
    %p219 = scmp.lt.s32.totalorder %s10, 9
    %p220 = pnand %p218, %p219
    %p221 = pneg %p220
    // Predicated region
    $region33: #{gpt_forward.16} parent=5 // pred_check
      _
    $region34: #{gpt_forward.16} parent=5 // pred_check_branch
      %223 = sbr.rel (%p220) target = $region36
    $region35: #{gpt_forward.16} parent=5 // pred_region
      %s224 = ssub.s32 %s10, 1
      %p225 = scmp.lt.s32.totalorder %s19, 1
      %s226 = scalar_select %p225, %s19, 1
      %p227 = scmp.lt.s32.totalorder %s20, 3
      %s228 = scalar_select %p227, %s20, 3
      %s229 = smul.addr %s226, 4
      %s230 = sadd.s32 %s228, %s229
      %s231 = smul.addr %s230, 4
      %s232 = scalar_lea.vmem %s0, %s231
      %p233 = pneg %p50
      %p234 = pneg %p47
      %p235 = scmp.lt.s32.totalorder %s19, 1
      %s236 = scalar_select %p235, %s19, 1
      %p237 = scmp.lt.s32.totalorder %s20, 3
      %s238 = scalar_select %p237, %s20, 3
      %s239 = smul.addr %s236, 4
      %s240 = sadd.s32 %s238, %s239
      %s241 = smul.addr %s240, 4
      %s242 = scalar_lea.vmem %s1, %s241
      %p243 = pneg %p78
      %p244 = pneg %p75
      %p245 = scmp.lt.s32.totalorder %s19, 1
      %s246 = scalar_select %p245, %s19, 1
      %p247 = scmp.lt.s32.totalorder %s20, 3
      %s248 = scalar_select %p247, %s20, 3
      %s249 = smul.addr %s246, 4
      %s250 = sadd.s32 %s248, %s249
      %s251 = smul.addr %s250, 4
      %s252 = scalar_lea.vmem %s2, %s251
      %p253 = pneg %p106
      %p254 = pneg %p103
      %p255 = scmp.lt.s32.totalorder %s19, 1
      %s256 = scalar_select %p255, %s19, 1
      %s257 = scalar_lea.vmem %s3, %s256
      %p258 = pneg %p132
      %p259 = pneg %p129
      %p260 = pneg %p160
      %p261 = pneg %p157
      %p262 = scmp.lt.s32.totalorder %s19, 1
      %s263 = scalar_select %p262, %s19, 1
      %p264 = scmp.lt.s32.totalorder %s20, 3
      %s265 = scalar_select %p264, %s20, 3
      %s266 = smul.addr %s263, 4
      %s267 = sadd.s32 %s265, %s266
      %s268 = smul.addr %s267, 4
      %s269 = scalar_lea.vmem %s4, %s268
      %p270 = scmp.lt.s32.totalorder %s19, 1
      %s271 = scalar_select %p270, %s19, 1
      %p272 = scmp.lt.s32.totalorder %s20, 3
      %s273 = scalar_select %p272, %s20, 3
      %s274 = smul.addr %s271, 4
      %s275 = sadd.s32 %s273, %s274
      %s276 = smul.addr %s275, 4
      %s277 = scalar_lea.vmem %s0, %s276
      %p278 = scmp.lt.s32.totalorder %s19, 1
      %s279 = scalar_select %p278, %s19, 1
      %p280 = scmp.lt.s32.totalorder %s20, 3
      %s281 = scalar_select %p280, %s20, 3
      %s282 = smul.addr %s279, 4
      %s283 = sadd.s32 %s281, %s282
      %s284 = smul.addr %s283, 4
      %s285 = scalar_lea.vmem %s1, %s284
      %p286 = scmp.lt.s32.totalorder %s19, 1
      %s287 = scalar_select %p286, %s19, 1
      %p288 = scmp.lt.s32.totalorder %s20, 3
      %s289 = scalar_select %p288, %s20, 3
      %s290 = smul.addr %s287, 4
      %s291 = sadd.s32 %s289, %s290
      %s292 = smul.addr %s291, 4
      %s293 = scalar_lea.vmem %s2, %s292
      %p294 = scmp.lt.s32.totalorder %s19, 1
      %s295 = scalar_select %p294, %s19, 1
      %s296 = scalar_lea.vmem %s3, %s295
      %p297 = scmp.lt.s32.totalorder %s19, 1
      %s298 = scalar_select %p297, %s19, 1
      %p299 = scmp.lt.s32.totalorder %s20, 3
      %s300 = scalar_select %p299, %s20, 3
      %s301 = smul.addr %s298, 4
      %s302 = sadd.s32 %s300, %s301
      %s303 = smul.addr %s302, 4
      %s304 = scalar_lea.vmem %s4, %s303
      %v306 = vld [vmem:[%s277] sm:$0xf]
      %v307 = vld [vmem:[%s285] sm:$0xf]
      %vm308 = vcmask 64512
      %v310 = vsel %vm308, %v306, 0
      %v313 = vsel %vm308, %v307, 0
      %315 = vmatprep.subr.bf16.mxu0 0
      %316 = vmatpush1.bf16.xpose.msra.mxu0 %v313
      %317 = vmatprep.subr.bf16.mxu0 0
      %318 = vmatpush1.bf16.xpose.msra.mxu0 0
      %319 = vmatprep.subr.bf16.mxu0 0
      %320 = vmatpush1.bf16.xpose.msra.mxu0 0
      %321 = vmatprep.subr.bf16.mxu0 0
      %322 = vmatpush1.bf16.xpose.msra.mxu0 0
      %323 = vmatprep.subr.bf16.mxu0 0
      %324 = vmatpush1.bf16.xpose.msra.mxu0 0
      %325 = vmatprep.subr.bf16.mxu0 0
      %326 = vmatpush1.bf16.xpose.msra.mxu0 0
      %327 = vmatprep.subr.bf16.mxu0 0
      %328 = vmatpush1.bf16.xpose.msra.mxu0 0
      %329 = vmatprep.subr.bf16.mxu0 0
      %330 = vmatpush1.bf16.xpose.msra.mxu0 0
      %331 = vmatprep.subr.bf16.mxu0 0
      %332 = vmatpush1.bf16.xpose.msra.mxu0 0
      %333 = vmatprep.subr.bf16.mxu0 0
      %334 = vmatpush1.bf16.xpose.msra.mxu0 0
      %335 = vmatprep.subr.bf16.mxu0 0
      %336 = vmatpush1.bf16.xpose.msra.mxu0 0
      %337 = vmatprep.subr.bf16.mxu0 0
      %338 = vmatpush1.bf16.xpose.msra.mxu0 0
      %339 = vmatprep.subr.bf16.mxu0 0
      %340 = vmatpush1.bf16.xpose.msra.mxu0 0
      %341 = vmatprep.subr.bf16.mxu0 0
      %342 = vmatpush1.bf16.xpose.msra.mxu0 0
      %343 = vmatprep.subr.bf16.mxu0 0
      %344 = vmatpush1.bf16.xpose.msra.mxu0 0
      %345 = vmatprep.subr.bf16.mxu0 0
      %346 = vmatpush1.bf16.xpose.msra.mxu0 0
      %347 = vmatprep.mubr.bf16.mxu0 0
      %348 = vmatmul.mubr.bf16.gmra.mrb[0].mxu0 %v310
      %v349 = vpop.f32.mrb[0].mxu0
      %v350 = vadd.f32 0.0, %v349
      %v351 = vpop.f32.mrb[0].mxu0
      %v352 = vpop.f32.mrb[0].mxu0
      %v353 = vpop.f32.mrb[0].mxu0
      %354 = vdwg.mxu0
      %v355 = vlaneseq
      %v356 = vshrl.u32 %v355, 7
      %v357 = vlaneseq
      %v358 = vand.u32 %v357, 127
      %vm359 = vcmp.ge.s32.totalorder %v356, %v358
      %v360 = vmul.f32 %v350, 0.35355338
      %v361 = vld [vmem:[%s296] sm:$0x1]
      %v363 = vlaneseq
      %v364 = vshrl.u32 %v363, 7
      %v365 = vsub.s32 0, %v364
      %v366 = vrot.slane %v361, %v365
      %v368 = vadd.f32 %v360, %v366
      %v369 = vsel %vm359, %v368, -1e+30
      %v370 = vsel %vm308, %v369, -inf
      %371 = vmax.xlane.f32.xlu0 %v370
      %v372 = vpop.xlane.xlu0 %371
      %v373 = vsub.f32 %v369, %v372
      %v374 = vmul.f32 %v373, 1.442695
      %v375 = vpow.pop %v374
      %v376 = vsel %vm308, %v375, 0.0
      %377 = vadd.xlane.f32.xlu0 %v376
      %v378 = vpop.xlane.xlu0 %377
      %v379 = vpack.c.bf16 %v375, %v375
      %v380 = vld [vmem:[%s293] sm:$0xf]
      %v382 = vsel %vm308, %v379, 0
      %vm384 = vcmask 1043456
      %v386 = vsel %vm384, %v380, 0
      %388 = vmatprep.subr.bf16.mxu0 0
      %389 = vmatpush1.bf16.msra.mxu0 %v386
      %390 = vmatprep.subr.bf16.mxu0 0
      %391 = vmatpush1.bf16.msra.mxu0 0
      %392 = vmatprep.subr.bf16.mxu0 0
      %393 = vmatpush1.bf16.msra.mxu0 0
      %394 = vmatprep.subr.bf16.mxu0 0
      %395 = vmatpush1.bf16.msra.mxu0 0
      %396 = vmatprep.subr.bf16.mxu0 0
      %397 = vmatpush1.bf16.msra.mxu0 0
      %398 = vmatprep.subr.bf16.mxu0 0
      %399 = vmatpush1.bf16.msra.mxu0 0
      %400 = vmatprep.subr.bf16.mxu0 0
      %401 = vmatpush1.bf16.msra.mxu0 0
      %402 = vmatprep.subr.bf16.mxu0 0
      %403 = vmatpush1.bf16.msra.mxu0 0
      %404 = vmatprep.subr.bf16.mxu0 0
      %405 = vmatpush1.bf16.msra.mxu0 0
      %406 = vmatprep.subr.bf16.mxu0 0
      %407 = vmatpush1.bf16.msra.mxu0 0
      %408 = vmatprep.subr.bf16.mxu0 0
      %409 = vmatpush1.bf16.msra.mxu0 0
      %410 = vmatprep.subr.bf16.mxu0 0
      %411 = vmatpush1.bf16.msra.mxu0 0
      %412 = vmatprep.subr.bf16.mxu0 0
      %413 = vmatpush1.bf16.msra.mxu0 0
      %414 = vmatprep.subr.bf16.mxu0 0
      %415 = vmatpush1.bf16.msra.mxu0 0
      %416 = vmatprep.subr.bf16.mxu0 0
      %417 = vmatpush1.bf16.msra.mxu0 0
      %418 = vmatprep.subr.bf16.mxu0 0
      %419 = vmatpush1.bf16.msra.mxu0 0
      %420 = vmatprep.mubr.bf16.mxu0 0
      %421 = vmatmul.mubr.bf16.gmra.mrb[0].mxu0 %v382
      %v422 = vpop.f32.mrb[0].mxu0
      %v423 = vadd.f32 0.0, %v422
      %v424 = vpop.f32.mrb[0].mxu0
      %v425 = vpop.f32.mrb[0].mxu0
      %v426 = vpop.f32.mrb[0].mxu0
      %427 = vdwg.mxu0
      %v428 = vrcp.pop %v378
      %v429 = vmul.f32 %v423, %v428
      %v430 = vpack.c.bf16 %v429, %v429
      %vm431 = vcmask 60416
      %432 = vst.msk [vmem:[%s304] sm:$0xf] %vm431, %v430
      %p433 = scmp.lt.s32.totalorder %s19, 1
      %s434 = scalar_select %p433, %s19, 1
      %p435 = scmp.lt.s32.totalorder %s20, 3
      %s436 = scalar_select %p435, %s20, 3
      %s437 = smul.addr %s434, 4
      %s438 = sadd.s32 %s436, %s437
      %s439 = smul.addr %s438, 4
      %s440 = scalar_lea.vmem %s4, %s439
      // Predicated region
      $region37: #{gpt_forward.16} parent=35 // pred_check
        %p441 = pneg %p157
      $region38: #{gpt_forward.16} parent=35 // pred_check_branch
        %443 = sbr.rel (%p441) target = $region40
      $region39: #{gpt_forward.16} parent=35 // pred_region
        _
      $region40: #{gpt_forward.16} parent=35 // pred_fallthru
        _
    $region36: #{gpt_forward.16} parent=5 // pred_fallthru
      _
    %p444 = scmp.le.s32.totalorder 2, %s10
    // Predicated region
    $region41: #{gpt_forward.16} parent=5 // pred_check
      %p445 = pneg %p444
    $region42: #{gpt_forward.16} parent=5 // pred_check_branch
      %447 = sbr.rel (%p445) target = $region44
    $region43: #{gpt_forward.16} parent=5 // pred_region
      %s448 = ssub.s32 %s10, 2
      // Predicated region
      $region45: #{gpt_forward.16} parent=43 // pred_check
        %p449 = pneg %p163
      $region46: #{gpt_forward.16} parent=43 // pred_check_branch
        %451 = sbr.rel (%p449) target = $region48
      $region47: #{gpt_forward.16} parent=43 // pred_region
        %p452 = scmp.lt.s32.totalorder %s21, 1
        %s453 = scalar_select %p452, %s21, 1
        %p454 = scmp.lt.s32.totalorder %s22, 3
        %s455 = scalar_select %p454, %s22, 3
        %s456 = smul.addr %s453, 4
        %s457 = sadd.s32 %s455, %s456
        %s458 = smul.addr %s457, 4
        %s459 = scalar_lea.vmem %s4, %s458
      $region48: #{gpt_forward.16} parent=43 // pred_fallthru
        _
    $region44: #{gpt_forward.16} parent=5 // pred_fallthru
      _
  $region6: #{gpt_forward.16} parent=0 // loop_footer
    %s14 = sadd.s32 1, %s10
  $region7: #{gpt_forward.16} parent=0 // loop_footer_branch
    %9 = sbr.rel target = $region3
  $region8: #{gpt_forward.16} parent=0 // loop_exit
    _

// kernel: gpt_forward.18
$region0: #{gpt_forward.18}
  #allocation0 [shape = 'u32[]', space=smem, size = 0x4, offset = 0x4, fixed_abs, tag = 'smem constant byte address 0x4 - core index']
  #allocation1 [shape = 'u32[144,128]{1,0:T(1,128)}', space=vmem, size = 0x12000, scoped, tag = 'internal scratch']
  %s0 = inlined_call_operand.vmem [shape: bf16[16,32], index: 0, kind: input, shape index: {}]
  %s1 = inlined_call_operand.vmem [shape: bf16[16,32], index: 1, kind: input, shape index: {}]
  %s2 = inlined_call_operand.vmem [shape: f32[2,32], index: 2, kind: input, shape index: {}]
  %s3 = inlined_call_operand.vmem [shape: bf16[16,32], index: 3, kind: output, shape index: {}]
  %s4 = sld [smem:[#allocation0]]
  $region22: #{gpt_forward.18} parent=0
    _
  %s6 = ssub.s32 1, %s4
  %s7 = scalar_select 0, %s6, %s4
  // Predicated region
  $region2: #{gpt_forward.18} parent=0 // pred_check
    _
  $region3: #{gpt_forward.18} parent=0 // pred_check_branch
    %9 = sbr.rel (0) target = $region5
  $region4: #{gpt_forward.18} parent=0 // pred_region
    _
  $region5: #{gpt_forward.18} parent=0 // pred_fallthru
    _
  // Predicated region
  $region6: #{gpt_forward.18} parent=0 // pred_check
    _
  $region7: #{gpt_forward.18} parent=0 // pred_check_branch
    %11 = sbr.rel (0) target = $region9
  $region8: #{gpt_forward.18} parent=0 // pred_region
    _
  $region9: #{gpt_forward.18} parent=0 // pred_fallthru
    _
  // Predicated region
  $region10: #{gpt_forward.18} parent=0 // pred_check
    _
  $region11: #{gpt_forward.18} parent=0 // pred_check_branch
    %13 = sbr.rel (0) target = $region13
  $region12: #{gpt_forward.18} parent=0 // pred_region
    _
  $region13: #{gpt_forward.18} parent=0 // pred_fallthru
    _
  %v14 = vld [vmem:[%s0] sm:$0xf]
  %v15 = vld [vmem:[%s0 + $0x4] sm:$0xf]
  %v16 = vunpack.c.l.bf16 %v14
  %v17 = vunpack.c.l.bf16 %v15
  %v18 = vld [vmem:[%s1] sm:$0xf]
  %v19 = vld [vmem:[%s1 + $0x4] sm:$0xf]
  %v20 = vunpack.c.l.bf16 %v18
  %v21 = vunpack.c.l.bf16 %v19
  %v22 = vadd.f32 %v16, %v20
  %v23 = vadd.f32 %v17, %v21
  %vm24 = vcmask 261120
  %v25 = vsel %vm24, %v22, 0.0
  %26 = vadd.xlane.f32.xlu0 %v25
  %v27 = vpop.xlane.xlu0 %26
  %v28 = vsel %vm24, %v23, 0.0
  %29 = vadd.xlane.f32.xlu0 %v28
  %v30 = vpop.xlane.xlu0 %29
  %v31 = vrcp.pop 32.0
  %v32 = vmul.f32 %v27, %v31
  %v33 = vmul.f32 %v30, %v31
  %v34 = vsub.f32 %v22, %v32
  %v35 = vsub.f32 %v23, %v33
  %v36 = vmul.f32 %v34, %v34
  %v37 = vmul.f32 %v35, %v35
  %v38 = vsel %vm24, %v36, 0.0
  %39 = vadd.xlane.f32.xlu0 %v38
  %v40 = vpop.xlane.xlu0 %39
  %v41 = vsel %vm24, %v37, 0.0
  %42 = vadd.xlane.f32.xlu0 %v41
  %v43 = vpop.xlane.xlu0 %42
  %v44 = vmul.f32 %v40, %v31
  %v45 = vmul.f32 %v43, %v31
  %v46 = vadd.f32 %v44, 1e-05
  %v47 = vadd.f32 %v45, 1e-05
  %v48 = vrsqrt.pop %v46
  %v49 = vrsqrt.pop %v47
  %v50 = vmul.f32 %v34, %v48
  %v51 = vmul.f32 %v35, %v49
  %v52 = vld [vmem:[%s2] sm:$0x1]
  %v53 = vlaneseq
  %v54 = vshrl.u32 %v53, 7
  %v55 = vsub.s32 0, %v54
  %v56 = vrot.slane %v52, %v55
  %v57 = vmul.f32 %v50, %v56
  %v58 = vmul.f32 %v51, %v56
  %v59 = vld [vmem:[%s2 + $0x1] sm:$0x1]
  %v60 = vlaneseq
  %v61 = vshrl.u32 %v60, 7
  %v62 = vsub.s32 0, %v61
  %v63 = vrot.slane %v59, %v62
  %v64 = vadd.f32 %v57, %v63
  %v65 = vadd.f32 %v58, %v63
  %v66 = vpack.c.bf16 %v65, %v64
  %v68 = vunpack.c.l.b16 %v66
  %v69 = vunpack.c.h.b16 %v66
  %v70 = vpack.c.b16 %v68, %v68
  %v71 = vpack.c.b16 %v69, %v69
  %vm74 = vcmask 257024
  %75 = vst.msk [vmem:[%s3] sm:$0xf] %vm74, %v70
  %76 = vst.msk [vmem:[%s3 + $0x4] sm:$0xf] %vm74, %v71
  // Predicated region
  $region14: #{gpt_forward.18} parent=0 // pred_check
    _
  $region15: #{gpt_forward.18} parent=0 // pred_check_branch
    %78 = sbr.rel (0) target = $region17
  $region16: #{gpt_forward.18} parent=0 // pred_region
    _
  $region17: #{gpt_forward.18} parent=0 // pred_fallthru
    _
  // Predicated region
  $region18: #{gpt_forward.18} parent=0 // pred_check
    _
  $region19: #{gpt_forward.18} parent=0 // pred_check_branch
    %80 = sbr.rel (0) target = $region21
  $region20: #{gpt_forward.18} parent=0 // pred_region
    _
  $region21: #{gpt_forward.18} parent=0 // pred_fallthru
    _

// kernel: gpt_forward.17
$region0: #{gpt_forward.17}
  #allocation0 [shape = 'u32[]', space=smem, size = 0x4, offset = 0x4, fixed_abs, tag = 'smem constant byte address 0x4 - core index']
  #allocation1 [shape = 'u32[144,128]{1,0:T(1,128)}', space=vmem, size = 0x12000, scoped, tag = 'internal scratch']
  #allocation2 [shape = 'f32[16,32]{1,0:T(8,128)}', space=vmem, size = 0x2000, scoped, tag = 'scratch operand']
  %s0 = inlined_call_operand.vmem [shape: bf16[16,32], index: 0, kind: input, shape index: {}]
  %s1 = inlined_call_operand.vmem [shape: bf16[32,32], index: 1, kind: input, shape index: {}]
  %s2 = inlined_call_operand.vmem [shape: f32[1,32], index: 2, kind: input, shape index: {}]
  %s3 = inlined_call_operand.vmem [shape: bf16[16,32], index: 3, kind: output, shape index: {}]
  %s4 = sld [smem:[#allocation0]]
  $region30: #{gpt_forward.17} parent=0
    _
  %s6 = ssub.s32 1, %s4
  %s7 = scalar_select 0, %s6, %s4
  // Predicated region
  $region2: #{gpt_forward.17} parent=0 // pred_check
    _
  $region3: #{gpt_forward.17} parent=0 // pred_check_branch
    %9 = sbr.rel (0) target = $region5
  $region4: #{gpt_forward.17} parent=0 // pred_region
    _
  $region5: #{gpt_forward.17} parent=0 // pred_fallthru
    _
  // Predicated region
  $region6: #{gpt_forward.17} parent=0 // pred_check
    _
  $region7: #{gpt_forward.17} parent=0 // pred_check_branch
    %11 = sbr.rel (0) target = $region9
  $region8: #{gpt_forward.17} parent=0 // pred_region
    _
  $region9: #{gpt_forward.17} parent=0 // pred_fallthru
    _
  // Predicated region
  $region10: #{gpt_forward.17} parent=0 // pred_check
    _
  $region11: #{gpt_forward.17} parent=0 // pred_check_branch
    %13 = sbr.rel (0) target = $region13
  $region12: #{gpt_forward.17} parent=0 // pred_region
    _
  $region13: #{gpt_forward.17} parent=0 // pred_fallthru
    _
  %p15 = scmp.eq.s32.totalorder 0, 0
  // Predicated region
  $region14: #{gpt_forward.17} parent=0 // pred_check
    %p16 = pneg %p15
  $region15: #{gpt_forward.17} parent=0 // pred_check_branch
    %18 = sbr.rel (%p16) target = $region17
  $region16: #{gpt_forward.17} parent=0 // pred_region
    %vm19 = vcmask 261120
    %20 = vst.msk [vmem:[#allocation2] sm:$0xff] %vm19, 0.0
    %21 = vst.msk [vmem:[#allocation2 + $0x8] sm:$0xff] %vm19, 0.0
  $region17: #{gpt_forward.17} parent=0 // pred_fallthru
    _
  %v22 = vld [vmem:[#allocation2] sm:$0xff]
  %v23 = vld [vmem:[#allocation2 + $0x8] sm:$0xff]
  %v24 = vld [vmem:[%s0] sm:$0xf]
  %v25 = vld [vmem:[%s0 + $0x4] sm:$0xf]
  %v26 = vld [vmem:[%s1] sm:$0xf]
  %v27 = vld [vmem:[%s1 + $0x4] sm:$0xf]
  %v28 = vld [vmem:[%s1 + $0x8] sm:$0xf]
  %v29 = vld [vmem:[%s1 + $0xc] sm:$0xf]
  %v32 = vunpack.c.l.b16 %v24
  %v33 = vunpack.c.l.b16 %v25
  %v34 = vpack.c.b16 %v33, %v32
  %v39 = vunpack.c.l.b16 %v26
  %v40 = vunpack.c.l.b16 %v27
  %v41 = vunpack.c.l.b16 %v28
  %v42 = vunpack.c.l.b16 %v29
  %v43 = vpack.c.b16 %v40, %v39
  %v44 = vpack.c.b16 %v42, %v41
  %vm47 = vcmask 261120
  %v49 = vsel %vm47, %v34, 0
  %51 = vmatprep.subr.bf16.mxu0 0
  %52 = vmatpush1.bf16.msra.mxu0 %v43
  %53 = vmatprep.subr.bf16.mxu0 0
  %54 = vmatpush1.bf16.msra.mxu0 %v44
  %55 = vmatprep.subr.bf16.mxu0 0
  %56 = vmatpush1.bf16.msra.mxu0 0
  %57 = vmatprep.subr.bf16.mxu0 0
  %58 = vmatpush1.bf16.msra.mxu0 0
  %59 = vmatprep.subr.bf16.mxu0 0
  %60 = vmatpush1.bf16.msra.mxu0 0
  %61 = vmatprep.subr.bf16.mxu0 0
  %62 = vmatpush1.bf16.msra.mxu0 0
  %63 = vmatprep.subr.bf16.mxu0 0
  %64 = vmatpush1.bf16.msra.mxu0 0
  %65 = vmatprep.subr.bf16.mxu0 0
  %66 = vmatpush1.bf16.msra.mxu0 0
  %67 = vmatprep.subr.bf16.mxu0 0
  %68 = vmatpush1.bf16.msra.mxu0 0
  %69 = vmatprep.subr.bf16.mxu0 0
  %70 = vmatpush1.bf16.msra.mxu0 0
  %71 = vmatprep.subr.bf16.mxu0 0
  %72 = vmatpush1.bf16.msra.mxu0 0
  %73 = vmatprep.subr.bf16.mxu0 0
  %74 = vmatpush1.bf16.msra.mxu0 0
  %75 = vmatprep.subr.bf16.mxu0 0
  %76 = vmatpush1.bf16.msra.mxu0 0
  %77 = vmatprep.subr.bf16.mxu0 0
  %78 = vmatpush1.bf16.msra.mxu0 0
  %79 = vmatprep.subr.bf16.mxu0 0
  %80 = vmatpush1.bf16.msra.mxu0 0
  %81 = vmatprep.subr.bf16.mxu0 0
  %82 = vmatpush1.bf16.msra.mxu0 0
  %83 = vmatprep.mubr.bf16.mxu0 0
  %84 = vmatmul.mubr.bf16.gmra.mrb[0].mxu0 %v49
  %v85 = vpop.f32.mrb[0].mxu0
  %v86 = vadd.f32 0.0, %v85
  %v87 = vpop.f32.mrb[0].mxu0
  %v88 = vpop.f32.mrb[0].mxu0
  %v89 = vadd.f32 0.0, %v88
  %v90 = vpop.f32.mrb[0].mxu0
  %91 = vdwg.mxu0
  %v92 = vadd.f32 %v22, %v86
  %v93 = vadd.f32 %v23, %v89
  %94 = vst.msk [vmem:[#allocation2] sm:$0xff] %vm47, %v92
  %95 = vst.msk [vmem:[#allocation2 + $0x8] sm:$0xff] %vm47, %v93
  // Predicated region
  $region18: #{gpt_forward.17} parent=0 // pred_check
    %p96 = pneg %p15
  $region19: #{gpt_forward.17} parent=0 // pred_check_branch
    %98 = sbr.rel (%p96) target = $region21
  $region20: #{gpt_forward.17} parent=0 // pred_region
    %v99 = vld [vmem:[#allocation2] sm:$0xff]
    %v100 = vld [vmem:[#allocation2 + $0x8] sm:$0xff]
    %v101 = vld [vmem:[%s2] sm:$0x1]
    %v103 = vlaneseq
    %v104 = vshrl.u32 %v103, 7
    %v105 = vsub.s32 0, %v104
    %v106 = vrot.slane %v101, %v105
    %v108 = vadd.f32 %v99, %v106
    %v109 = vadd.f32 %v100, %v106
    %v110 = vpack.c.bf16 %v109, %v108
    %v112 = vunpack.c.l.b16 %v110
    %v113 = vunpack.c.h.b16 %v110
    %v114 = vpack.c.b16 %v112, %v112
    %v115 = vpack.c.b16 %v113, %v113
    %vm118 = vcmask 257024
    %119 = vst.msk [vmem:[%s3] sm:$0xf] %vm118, %v114
    %120 = vst.msk [vmem:[%s3 + $0x4] sm:$0xf] %vm118, %v115
  $region21: #{gpt_forward.17} parent=0 // pred_fallthru
    _
  // Predicated region
  $region22: #{gpt_forward.17} parent=0 // pred_check
    _
  $region23: #{gpt_forward.17} parent=0 // pred_check_branch
    %122 = sbr.rel (0) target = $region25
  $region24: #{gpt_forward.17} parent=0 // pred_region
    _
  $region25: #{gpt_forward.17} parent=0 // pred_fallthru
    _
  // Predicated region
  $region26: #{gpt_forward.17} parent=0 // pred_check
    _
  $region27: #{gpt_forward.17} parent=0 // pred_check_branch
    %124 = sbr.rel (0) target = $region29
  $region28: #{gpt_forward.17} parent=0 // pred_region
    _
  $region29: #{gpt_forward.17} parent=0 // pred_fallthru
    _

// kernel: gpt_forward.19
$region0: #{gpt_forward.19}
  #allocation0 [shape = 'u32[]', space=smem, size = 0x4, offset = 0x4, fixed_abs, tag = 'smem constant byte address 0x4 - core index']
  #allocation1 [shape = 'u32[144,128]{1,0:T(1,128)}', space=vmem, size = 0x12000, scoped, tag = 'internal scratch']
  #allocation2 [shape = 'f32[16,128]{1,0:T(8,128)}', space=vmem, size = 0x2000, scoped, tag = 'scratch operand']
  %s0 = inlined_call_operand.vmem [shape: bf16[16,32], index: 0, kind: input, shape index: {}]
  %s1 = inlined_call_operand.vmem [shape: bf16[32,128], index: 1, kind: input, shape index: {}]
  %s2 = inlined_call_operand.vmem [shape: f32[1,128], index: 2, kind: input, shape index: {}]
  %s3 = inlined_call_operand.vmem [shape: bf16[16,128], index: 3, kind: output, shape index: {}]
  %s4 = sld [smem:[#allocation0]]
  $region30: #{gpt_forward.19} parent=0
    _
  %s6 = ssub.s32 1, %s4
  %s7 = scalar_select 0, %s6, %s4
  // Predicated region
  $region2: #{gpt_forward.19} parent=0 // pred_check
    _
  $region3: #{gpt_forward.19} parent=0 // pred_check_branch
    %9 = sbr.rel (0) target = $region5
  $region4: #{gpt_forward.19} parent=0 // pred_region
    _
  $region5: #{gpt_forward.19} parent=0 // pred_fallthru
    _
  // Predicated region
  $region6: #{gpt_forward.19} parent=0 // pred_check
    _
  $region7: #{gpt_forward.19} parent=0 // pred_check_branch
    %11 = sbr.rel (0) target = $region9
  $region8: #{gpt_forward.19} parent=0 // pred_region
    _
  $region9: #{gpt_forward.19} parent=0 // pred_fallthru
    _
  // Predicated region
  $region10: #{gpt_forward.19} parent=0 // pred_check
    _
  $region11: #{gpt_forward.19} parent=0 // pred_check_branch
    %13 = sbr.rel (0) target = $region13
  $region12: #{gpt_forward.19} parent=0 // pred_region
    _
  $region13: #{gpt_forward.19} parent=0 // pred_fallthru
    _
  %p15 = scmp.eq.s32.totalorder 0, 0
  // Predicated region
  $region14: #{gpt_forward.19} parent=0 // pred_check
    %p16 = pneg %p15
  $region15: #{gpt_forward.19} parent=0 // pred_check_branch
    %18 = sbr.rel (%p16) target = $region17
  $region16: #{gpt_forward.19} parent=0 // pred_region
    %19 = vst [vmem:[#allocation2] sm:$0xff] 0.0
    %20 = vst [vmem:[#allocation2 + $0x8] sm:$0xff] 0.0
  $region17: #{gpt_forward.19} parent=0 // pred_fallthru
    _
  %v21 = vld [vmem:[#allocation2] sm:$0xff]
  %v22 = vld [vmem:[#allocation2 + $0x8] sm:$0xff]
  %v23 = vld [vmem:[%s0] sm:$0xf]
  %v24 = vld [vmem:[%s0 + $0x4] sm:$0xf]
  %v25 = vld [vmem:[%s1] sm:$0xf]
  %v26 = vld [vmem:[%s1 + $0x4] sm:$0xf]
  %v27 = vld [vmem:[%s1 + $0x8] sm:$0xf]
  %v28 = vld [vmem:[%s1 + $0xc] sm:$0xf]
  %v31 = vunpack.c.l.b16 %v23
  %v32 = vunpack.c.l.b16 %v24
  %v33 = vpack.c.b16 %v32, %v31
  %v38 = vunpack.c.l.b16 %v25
  %v39 = vunpack.c.l.b16 %v26
  %v40 = vunpack.c.l.b16 %v27
  %v41 = vunpack.c.l.b16 %v28
  %v42 = vpack.c.b16 %v39, %v38
  %v43 = vpack.c.b16 %v41, %v40
  %vm46 = vcmask 261120
  %v48 = vsel %vm46, %v33, 0
  %50 = vmatprep.subr.bf16.mxu0 0
  %51 = vmatpush1.bf16.msra.mxu0 %v42
  %52 = vmatprep.subr.bf16.mxu0 0
  %53 = vmatpush1.bf16.msra.mxu0 %v43
  %54 = vmatprep.subr.bf16.mxu0 0
  %55 = vmatpush1.bf16.msra.mxu0 0
  %56 = vmatprep.subr.bf16.mxu0 0
  %57 = vmatpush1.bf16.msra.mxu0 0
  %58 = vmatprep.subr.bf16.mxu0 0
  %59 = vmatpush1.bf16.msra.mxu0 0
  %60 = vmatprep.subr.bf16.mxu0 0
  %61 = vmatpush1.bf16.msra.mxu0 0
  %62 = vmatprep.subr.bf16.mxu0 0
  %63 = vmatpush1.bf16.msra.mxu0 0
  %64 = vmatprep.subr.bf16.mxu0 0
  %65 = vmatpush1.bf16.msra.mxu0 0
  %66 = vmatprep.subr.bf16.mxu0 0
  %67 = vmatpush1.bf16.msra.mxu0 0
  %68 = vmatprep.subr.bf16.mxu0 0
  %69 = vmatpush1.bf16.msra.mxu0 0
  %70 = vmatprep.subr.bf16.mxu0 0
  %71 = vmatpush1.bf16.msra.mxu0 0
  %72 = vmatprep.subr.bf16.mxu0 0
  %73 = vmatpush1.bf16.msra.mxu0 0
  %74 = vmatprep.subr.bf16.mxu0 0
  %75 = vmatpush1.bf16.msra.mxu0 0
  %76 = vmatprep.subr.bf16.mxu0 0
  %77 = vmatpush1.bf16.msra.mxu0 0
  %78 = vmatprep.subr.bf16.mxu0 0
  %79 = vmatpush1.bf16.msra.mxu0 0
  %80 = vmatprep.subr.bf16.mxu0 0
  %81 = vmatpush1.bf16.msra.mxu0 0
  %82 = vmatprep.mubr.bf16.mxu0 0
  %83 = vmatmul.mubr.bf16.gmra.mrb[0].mxu0 %v48
  %v84 = vpop.f32.mrb[0].mxu0
  %v85 = vadd.f32 0.0, %v84
  %v86 = vpop.f32.mrb[0].mxu0
  %v87 = vpop.f32.mrb[0].mxu0
  %v88 = vadd.f32 0.0, %v87
  %v89 = vpop.f32.mrb[0].mxu0
  %90 = vdwg.mxu0
  %v91 = vadd.f32 %v21, %v85
  %v92 = vadd.f32 %v22, %v88
  %93 = vst [vmem:[#allocation2] sm:$0xff] %v91
  %94 = vst [vmem:[#allocation2 + $0x8] sm:$0xff] %v92
  // Predicated region
  $region18: #{gpt_forward.19} parent=0 // pred_check
    %p95 = pneg %p15
  $region19: #{gpt_forward.19} parent=0 // pred_check_branch
    %97 = sbr.rel (%p95) target = $region21
  $region20: #{gpt_forward.19} parent=0 // pred_region
    %v98 = vld [vmem:[#allocation2] sm:$0xff]
    %v99 = vld [vmem:[#allocation2 + $0x8] sm:$0xff]
    %v100 = vld [vmem:[%s2] sm:$0x1]
    %v102 = vlaneseq
    %v103 = vshrl.u32 %v102, 7
    %v104 = vsub.s32 0, %v103
    %v105 = vrot.slane %v100, %v104
    %v107 = vadd.f32 %v98, %v105
    %v108 = vadd.f32 %v99, %v105
    %v109 = vmul.f32 %v107, %v107
    %v110 = vmul.f32 %v108, %v108
    %v111 = vmul.f32 %v107, %v109
    %v112 = vmul.f32 %v108, %v110
    %v113 = vmul.f32 %v111, 0.044715
    %v114 = vmul.f32 %v112, 0.044715
    %v115 = vadd.f32 %v107, %v113
    %v116 = vadd.f32 %v108, %v114
    %v117 = vmul.f32 %v115, 0.7978846
    %v118 = vmul.f32 %v116, 0.7978846
    %v119 = vtanh.pop %v117
    %v120 = vtanh.pop %v118
    %v121 = vadd.f32 %v119, 1.0
    %v122 = vadd.f32 %v120, 1.0
    %v123 = vmul.f32 %v121, 0.5
    %v124 = vmul.f32 %v122, 0.5
    %v125 = vmul.f32 %v107, %v123
    %v126 = vmul.f32 %v108, %v124
    %v127 = vpack.c.bf16 %v126, %v125
    %v129 = vunpack.c.l.b16 %v127
    %v130 = vunpack.c.h.b16 %v127
    %v131 = vpack.c.b16 %v129, %v129
    %v132 = vpack.c.b16 %v130, %v130
    %135 = vst [vmem:[%s3] sm:$0xf] %v131
    %136 = vst [vmem:[%s3 + $0x4] sm:$0xf] %v132
  $region21: #{gpt_forward.19} parent=0 // pred_fallthru
    _
  // Predicated region
  $region22: #{gpt_forward.19} parent=0 // pred_check
    _
  $region23: #{gpt_forward.19} parent=0 // pred_check_branch
    %138 = sbr.rel (0) target = $region25
  $region24: #{gpt_forward.19} parent=0 // pred_region
    _
  $region25: #{gpt_forward.19} parent=0 // pred_fallthru
    _
  // Predicated region
  $region26: #{gpt_forward.19} parent=0 // pred_check
    _
  $region27: #{gpt_forward.19} parent=0 // pred_check_branch
    %140 = sbr.rel (0) target = $region29
  $region28: #{gpt_forward.19} parent=0 // pred_region
    _
  $region29: #{gpt_forward.19} parent=0 // pred_fallthru
    _

// kernel: gpt_forward.29
$region0: #{gpt_forward.29}
  #allocation0 [shape = 'u32[]', space=smem, size = 0x4, offset = 0x4, fixed_abs, tag = 'smem constant byte address 0x4 - core index']
  #allocation1 [shape = 'u32[144,128]{1,0:T(1,128)}', space=vmem, size = 0x12000, scoped, tag = 'internal scratch']
  #allocation2 [shape = 'f32[16,64]{1,0:T(8,128)}', space=vmem, size = 0x2000, scoped, tag = 'scratch operand']
  %s0 = inlined_call_operand.vmem [shape: bf16[16,32], index: 0, kind: input, shape index: {}]
  %s1 = inlined_call_operand.vmem [shape: bf16[32,64], index: 1, kind: input, shape index: {}]
  %s2 = inlined_call_operand.vmem [shape: f32[1,64], index: 2, kind: input, shape index: {}]
  %s3 = inlined_call_operand.hbm [shape: f32[16,64], index: 3, kind: output, shape index: {}]
  %s4 = sld [smem:[#allocation0]]
  $region30: #{gpt_forward.29} parent=0
    _
  %s6 = ssub.s32 1, %s4
  %s7 = scalar_select 0, %s6, %s4
  $region1: #{gpt_forward.29} parent=0
    #allocation3 [shape = 'u8[8192]{0}', space=vmem, size = 0x2000, scoped, tag = 'output window, operand 0, single buffered']
    #allocation4 [shape = 's32[1]{0}', space=sflag, size = 0x4, scoped, tag = 'scoped memory for gpt_forward.29']
    %8 = vsyncpa [#allocation4], 0
    // Predicated region
    $region2: #{gpt_forward.29} parent=1 // pred_check
      _
    $region3: #{gpt_forward.29} parent=1 // pred_check_branch
      %10 = sbr.rel (0) target = $region5
    $region4: #{gpt_forward.29} parent=1 // pred_region
      _
    $region5: #{gpt_forward.29} parent=1 // pred_fallthru
      _
    // Predicated region
    $region6: #{gpt_forward.29} parent=1 // pred_check
      _
    $region7: #{gpt_forward.29} parent=1 // pred_check_branch
      %12 = sbr.rel (0) target = $region9
    $region8: #{gpt_forward.29} parent=1 // pred_region
      _
    $region9: #{gpt_forward.29} parent=1 // pred_fallthru
      _
    // Predicated region
    $region10: #{gpt_forward.29} parent=1 // pred_check
      _
    $region11: #{gpt_forward.29} parent=1 // pred_check_branch
      %14 = sbr.rel (0) target = $region13
    $region12: #{gpt_forward.29} parent=1 // pred_region
      _
    $region13: #{gpt_forward.29} parent=1 // pred_fallthru
      _
    %p16 = scmp.eq.s32.totalorder 0, 0
    // Predicated region
    $region14: #{gpt_forward.29} parent=1 // pred_check
      %p17 = pneg %p16
    $region15: #{gpt_forward.29} parent=1 // pred_check_branch
      %19 = sbr.rel (%p17) target = $region17
    $region16: #{gpt_forward.29} parent=1 // pred_region
      %vm20 = vcmask 523264
      %21 = vst.msk [vmem:[#allocation2] sm:$0xff] %vm20, 0.0
      %22 = vst.msk [vmem:[#allocation2 + $0x8] sm:$0xff] %vm20, 0.0
    $region17: #{gpt_forward.29} parent=1 // pred_fallthru
      _
    %v23 = vld [vmem:[#allocation2] sm:$0xff]
    %v24 = vld [vmem:[#allocation2 + $0x8] sm:$0xff]
    %v25 = vld [vmem:[%s0] sm:$0xf]
    %v26 = vld [vmem:[%s0 + $0x4] sm:$0xf]
    %v27 = vld [vmem:[%s1] sm:$0xf]
    %v28 = vld [vmem:[%s1 + $0x4] sm:$0xf]
    %v29 = vld [vmem:[%s1 + $0x8] sm:$0xf]
    %v30 = vld [vmem:[%s1 + $0xc] sm:$0xf]
    %v33 = vunpack.c.l.b16 %v25
    %v34 = vunpack.c.l.b16 %v26
    %v35 = vpack.c.b16 %v34, %v33
    %v40 = vunpack.c.l.b16 %v27
    %v41 = vunpack.c.l.b16 %v28
    %v42 = vunpack.c.l.b16 %v29
    %v43 = vunpack.c.l.b16 %v30
    %v44 = vpack.c.b16 %v41, %v40
    %v45 = vpack.c.b16 %v43, %v42
    %vm48 = vcmask 261120
    %v50 = vsel %vm48, %v35, 0
    %52 = vmatprep.subr.bf16.mxu0 0
    %53 = vmatpush1.bf16.msra.mxu0 %v44
    %54 = vmatprep.subr.bf16.mxu0 0
    %55 = vmatpush1.bf16.msra.mxu0 %v45
    %56 = vmatprep.subr.bf16.mxu0 0
    %57 = vmatpush1.bf16.msra.mxu0 0
    %58 = vmatprep.subr.bf16.mxu0 0
    %59 = vmatpush1.bf16.msra.mxu0 0
    %60 = vmatprep.subr.bf16.mxu0 0
    %61 = vmatpush1.bf16.msra.mxu0 0
    %62 = vmatprep.subr.bf16.mxu0 0
    %63 = vmatpush1.bf16.msra.mxu0 0
    %64 = vmatprep.subr.bf16.mxu0 0
    %65 = vmatpush1.bf16.msra.mxu0 0
    %66 = vmatprep.subr.bf16.mxu0 0
    %67 = vmatpush1.bf16.msra.mxu0 0
    %68 = vmatprep.subr.bf16.mxu0 0
    %69 = vmatpush1.bf16.msra.mxu0 0
    %70 = vmatprep.subr.bf16.mxu0 0
    %71 = vmatpush1.bf16.msra.mxu0 0
    %72 = vmatprep.subr.bf16.mxu0 0
    %73 = vmatpush1.bf16.msra.mxu0 0
    %74 = vmatprep.subr.bf16.mxu0 0
    %75 = vmatpush1.bf16.msra.mxu0 0
    %76 = vmatprep.subr.bf16.mxu0 0
    %77 = vmatpush1.bf16.msra.mxu0 0
    %78 = vmatprep.subr.bf16.mxu0 0
    %79 = vmatpush1.bf16.msra.mxu0 0
    %80 = vmatprep.subr.bf16.mxu0 0
    %81 = vmatpush1.bf16.msra.mxu0 0
    %82 = vmatprep.subr.bf16.mxu0 0
    %83 = vmatpush1.bf16.msra.mxu0 0
    %84 = vmatprep.mubr.bf16.mxu0 0
    %85 = vmatmul.mubr.bf16.gmra.mrb[0].mxu0 %v50
    %v86 = vpop.f32.mrb[0].mxu0
    %v87 = vadd.f32 0.0, %v86
    %v88 = vpop.f32.mrb[0].mxu0
    %v89 = vpop.f32.mrb[0].mxu0
    %v90 = vadd.f32 0.0, %v89
    %v91 = vpop.f32.mrb[0].mxu0
    %92 = vdwg.mxu0
    %v93 = vadd.f32 %v23, %v87
    %v94 = vadd.f32 %v24, %v90
    %vm95 = vcmask 523264
    %96 = vst.msk [vmem:[#allocation2] sm:$0xff] %vm95, %v93
    %97 = vst.msk [vmem:[#allocation2 + $0x8] sm:$0xff] %vm95, %v94
    // Predicated region
    $region18: #{gpt_forward.29} parent=1 // pred_check
      %p98 = pneg %p16
    $region19: #{gpt_forward.29} parent=1 // pred_check_branch
      %100 = sbr.rel (%p98) target = $region21
    $region20: #{gpt_forward.29} parent=1 // pred_region
      %v101 = vld [vmem:[#allocation2] sm:$0xff]
      %v102 = vld [vmem:[#allocation2 + $0x8] sm:$0xff]
      %v103 = vld [vmem:[%s2] sm:$0x1]
      %v105 = vlaneseq
      %v106 = vshrl.u32 %v105, 7
      %v107 = vsub.s32 0, %v106
      %v108 = vrot.slane %v103, %v107
      %v110 = vadd.f32 %v101, %v108
      %v111 = vadd.f32 %v102, %v108
      %112 = vst.msk [vmem:[#allocation3] sm:$0xff] %vm95, %v110
      %113 = vst.msk [vmem:[#allocation3 + $0x8] sm:$0xff] %vm95, %v111
    $region21: #{gpt_forward.29} parent=1 // pred_fallthru
      _
    // Predicated region
    $region22: #{gpt_forward.29} parent=1 // pred_check
      _
    $region23: #{gpt_forward.29} parent=1 // pred_check_branch
      %115 = sbr.rel (0) target = $region25
    $region24: #{gpt_forward.29} parent=1 // pred_region
      %s117 = ssub.s32 256, 256
      %118 = vsyncadd [#allocation4], %s117
      %s119 = sshll.u32 [#allocation3], 4
      %s120 = int_to_ptr.vmem [resolvable:$true] %s119
      %125 = dma.vmem_to_hbm [thread:$0]  %s120, 256, %s3, [#allocation4], 128, 128, 8
    $region25: #{gpt_forward.29} parent=1 // pred_fallthru
      _
    // Predicated region
    $region26: #{gpt_forward.29} parent=1 // pred_check
      _
    $region27: #{gpt_forward.29} parent=1 // pred_check_branch
      %127 = sbr.rel (0) target = $region29
    $region28: #{gpt_forward.29} parent=1 // pred_region
      %128 = dma.done [#allocation4], 256
    $region29: #{gpt_forward.29} parent=1 // pred_fallthru
      _
    %129 = vsyncpa [#allocation4], 1

// kernel: gpt_forward.20
$region0: #{gpt_forward.20}
  #allocation0 [shape = 'u32[]', space=smem, size = 0x4, offset = 0x4, fixed_abs, tag = 'smem constant byte address 0x4 - core index']
  #allocation1 [shape = 'u32[144,128]{1,0:T(1,128)}', space=vmem, size = 0x12000, scoped, tag = 'internal scratch']
  #allocation2 [shape = 'f32[16,32]{1,0:T(8,128)}', space=vmem, size = 0x2000, scoped, tag = 'scratch operand']
  %s0 = inlined_call_operand.vmem [shape: bf16[16,128], index: 0, kind: input, shape index: {}]
  %s1 = inlined_call_operand.vmem [shape: bf16[128,32], index: 1, kind: input, shape index: {}]
  %s2 = inlined_call_operand.vmem [shape: f32[1,32], index: 2, kind: input, shape index: {}]
  %s3 = inlined_call_operand.vmem [shape: bf16[16,32], index: 3, kind: output, shape index: {}]
  %s4 = sld [smem:[#allocation0]]
  $region30: #{gpt_forward.20} parent=0
    _
  %s6 = ssub.s32 1, %s4
  %s7 = scalar_select 0, %s6, %s4
  // Predicated region
  $region2: #{gpt_forward.20} parent=0 // pred_check
    _
  $region3: #{gpt_forward.20} parent=0 // pred_check_branch
    %9 = sbr.rel (0) target = $region5
  $region4: #{gpt_forward.20} parent=0 // pred_region
    _
  $region5: #{gpt_forward.20} parent=0 // pred_fallthru
    _
  // Predicated region
  $region6: #{gpt_forward.20} parent=0 // pred_check
    _
  $region7: #{gpt_forward.20} parent=0 // pred_check_branch
    %11 = sbr.rel (0) target = $region9
  $region8: #{gpt_forward.20} parent=0 // pred_region
    _
  $region9: #{gpt_forward.20} parent=0 // pred_fallthru
    _
  // Predicated region
  $region10: #{gpt_forward.20} parent=0 // pred_check
    _
  $region11: #{gpt_forward.20} parent=0 // pred_check_branch
    %13 = sbr.rel (0) target = $region13
  $region12: #{gpt_forward.20} parent=0 // pred_region
    _
  $region13: #{gpt_forward.20} parent=0 // pred_fallthru
    _
  %p15 = scmp.eq.s32.totalorder 0, 0
  // Predicated region
  $region14: #{gpt_forward.20} parent=0 // pred_check
    %p16 = pneg %p15
  $region15: #{gpt_forward.20} parent=0 // pred_check_branch
    %18 = sbr.rel (%p16) target = $region17
  $region16: #{gpt_forward.20} parent=0 // pred_region
    %vm19 = vcmask 261120
    %20 = vst.msk [vmem:[#allocation2] sm:$0xff] %vm19, 0.0
    %21 = vst.msk [vmem:[#allocation2 + $0x8] sm:$0xff] %vm19, 0.0
  $region17: #{gpt_forward.20} parent=0 // pred_fallthru
    _
  %v22 = vld [vmem:[#allocation2] sm:$0xff]
  %v23 = vld [vmem:[#allocation2 + $0x8] sm:$0xff]
  %v24 = vld [vmem:[%s0] sm:$0xf]
  %v25 = vld [vmem:[%s0 + $0x4] sm:$0xf]
  %v26 = vld [vmem:[%s1] sm:$0xf]
  %v27 = vld [vmem:[%s1 + $0x4] sm:$0xf]
  %v28 = vld [vmem:[%s1 + $0x8] sm:$0xf]
  %v29 = vld [vmem:[%s1 + $0xc] sm:$0xf]
  %v30 = vld [vmem:[%s1 + $0x10] sm:$0xf]
  %v31 = vld [vmem:[%s1 + $0x14] sm:$0xf]
  %v32 = vld [vmem:[%s1 + $0x18] sm:$0xf]
  %v33 = vld [vmem:[%s1 + $0x1c] sm:$0xf]
  %v34 = vld [vmem:[%s1 + $0x20] sm:$0xf]
  %v35 = vld [vmem:[%s1 + $0x24] sm:$0xf]
  %v36 = vld [vmem:[%s1 + $0x28] sm:$0xf]
  %v37 = vld [vmem:[%s1 + $0x2c] sm:$0xf]
  %v38 = vld [vmem:[%s1 + $0x30] sm:$0xf]
  %v39 = vld [vmem:[%s1 + $0x34] sm:$0xf]
  %v40 = vld [vmem:[%s1 + $0x38] sm:$0xf]
  %v41 = vld [vmem:[%s1 + $0x3c] sm:$0xf]
  %v44 = vunpack.c.l.b16 %v24
  %v45 = vunpack.c.l.b16 %v25
  %v46 = vpack.c.b16 %v45, %v44
  %v64 = vunpack.c.l.b16 %v26
  %v65 = vunpack.c.l.b16 %v27
  %v66 = vunpack.c.l.b16 %v28
  %v67 = vunpack.c.l.b16 %v29
  %v68 = vunpack.c.l.b16 %v30
  %v69 = vunpack.c.l.b16 %v31
  %v70 = vunpack.c.l.b16 %v32
  %v71 = vunpack.c.l.b16 %v33
  %v72 = vunpack.c.l.b16 %v34
  %v73 = vunpack.c.l.b16 %v35
  %v74 = vunpack.c.l.b16 %v36
  %v75 = vunpack.c.l.b16 %v37
  %v76 = vunpack.c.l.b16 %v38
  %v77 = vunpack.c.l.b16 %v39
  %v78 = vunpack.c.l.b16 %v40
  %v79 = vunpack.c.l.b16 %v41
  %v80 = vpack.c.b16 %v65, %v64
  %v81 = vpack.c.b16 %v67, %v66
  %v82 = vpack.c.b16 %v69, %v68
  %v83 = vpack.c.b16 %v71, %v70
  %v84 = vpack.c.b16 %v73, %v72
  %v85 = vpack.c.b16 %v75, %v74
  %v86 = vpack.c.b16 %v77, %v76
  %v87 = vpack.c.b16 %v79, %v78
  %96 = vmatprep.subr.bf16.mxu0 0
  %97 = vmatpush1.bf16.msra.mxu0 %v80
  %98 = vmatprep.subr.bf16.mxu0 0
  %99 = vmatpush1.bf16.msra.mxu0 %v81
  %100 = vmatprep.subr.bf16.mxu0 0
  %101 = vmatpush1.bf16.msra.mxu0 %v82
  %102 = vmatprep.subr.bf16.mxu0 0
  %103 = vmatpush1.bf16.msra.mxu0 %v83
  %104 = vmatprep.subr.bf16.mxu0 0
  %105 = vmatpush1.bf16.msra.mxu0 %v84
  %106 = vmatprep.subr.bf16.mxu0 0
  %107 = vmatpush1.bf16.msra.mxu0 %v85
  %108 = vmatprep.subr.bf16.mxu0 0
  %109 = vmatpush1.bf16.msra.mxu0 %v86
  %110 = vmatprep.subr.bf16.mxu0 0
  %111 = vmatpush1.bf16.msra.mxu0 %v87
  %112 = vmatprep.subr.bf16.mxu0 0
  %113 = vmatpush1.bf16.msra.mxu0 0
  %114 = vmatprep.subr.bf16.mxu0 0
  %115 = vmatpush1.bf16.msra.mxu0 0
  %116 = vmatprep.subr.bf16.mxu0 0
  %117 = vmatpush1.bf16.msra.mxu0 0
  %118 = vmatprep.subr.bf16.mxu0 0
  %119 = vmatpush1.bf16.msra.mxu0 0
  %120 = vmatprep.subr.bf16.mxu0 0
  %121 = vmatpush1.bf16.msra.mxu0 0
  %122 = vmatprep.subr.bf16.mxu0 0
  %123 = vmatpush1.bf16.msra.mxu0 0
  %124 = vmatprep.subr.bf16.mxu0 0
  %125 = vmatpush1.bf16.msra.mxu0 0
  %126 = vmatprep.subr.bf16.mxu0 0
  %127 = vmatpush1.bf16.msra.mxu0 0
  %128 = vmatprep.mubr.bf16.mxu0 0
  %129 = vmatmul.mubr.bf16.gmra.mrb[0].mxu0 %v46
  %v130 = vpop.f32.mrb[0].mxu0
  %v131 = vadd.f32 0.0, %v130
  %v132 = vpop.f32.mrb[0].mxu0
  %v133 = vpop.f32.mrb[0].mxu0
  %v134 = vadd.f32 0.0, %v133
  %v135 = vpop.f32.mrb[0].mxu0
  %136 = vdwg.mxu0
  %v137 = vadd.f32 %v22, %v131
  %v138 = vadd.f32 %v23, %v134
  %vm139 = vcmask 261120
  %140 = vst.msk [vmem:[#allocation2] sm:$0xff] %vm139, %v137
  %141 = vst.msk [vmem:[#allocation2 + $0x8] sm:$0xff] %vm139, %v138
  // Predicated region
  $region18: #{gpt_forward.20} parent=0 // pred_check
    %p142 = pneg %p15
  $region19: #{gpt_forward.20} parent=0 // pred_check_branch
    %144 = sbr.rel (%p142) target = $region21
  $region20: #{gpt_forward.20} parent=0 // pred_region
    %v145 = vld [vmem:[#allocation2] sm:$0xff]
    %v146 = vld [vmem:[#allocation2 + $0x8] sm:$0xff]
    %v147 = vld [vmem:[%s2] sm:$0x1]
    %v149 = vlaneseq
    %v150 = vshrl.u32 %v149, 7
    %v151 = vsub.s32 0, %v150
    %v152 = vrot.slane %v147, %v151
    %v154 = vadd.f32 %v145, %v152
    %v155 = vadd.f32 %v146, %v152
    %v156 = vpack.c.bf16 %v155, %v154
    %v158 = vunpack.c.l.b16 %v156
    %v159 = vunpack.c.h.b16 %v156
    %v160 = vpack.c.b16 %v158, %v158
    %v161 = vpack.c.b16 %v159, %v159
    %vm164 = vcmask 257024
    %165 = vst.msk [vmem:[%s3] sm:$0xf] %vm164, %v160
    %166 = vst.msk [vmem:[%s3 + $0x4] sm:$0xf] %vm164, %v161
  $region21: #{gpt_forward.20} parent=0 // pred_fallthru
    _
  // Predicated region
  $region22: #{gpt_forward.20} parent=0 // pred_check
    _
  $region23: #{gpt_forward.20} parent=0 // pred_check_branch
    %168 = sbr.rel (0) target = $region25
  $region24: #{gpt_forward.20} parent=0 // pred_region
    _
  $region25: #{gpt_forward.20} parent=0 // pred_fallthru
    _
  // Predicated region
  $region26: #{gpt_forward.20} parent=0 // pred_check
    _
  $region27: #{gpt_forward.20} parent=0 // pred_check_branch
    %170 = sbr.rel (0) target = $region29
  $region28: #{gpt_forward.20} parent=0 // pred_region
    _
  $region29: #{gpt_forward.20} parent=0 // pred_fallthru
    _

</llo_original>
